<compile_context>
chip_gen: v6e
topology: v6e:2x2x1
jax: 0.10.0
libtpu: 0.0.40
codegen_flags: <defaults>
</compile_context>

<pallas_src>
import functools
import math

import jax
import jax.numpy as jnp
from jax.experimental import pallas as pl
from jax.experimental.pallas import tpu as pltpu


def _round_up(x, m):
    return (x + m - 1) // m * m


def _cdiv(a, b):
    return -(-a // b)


def _tiled_bytes(shape, itemsize):
    """Approx VMEM bytes of one buffer after (8, 128) tiling of the last two dims."""
    if len(shape) == 0:
        return itemsize
    if len(shape) == 1:
        return _round_up(shape[0], 128) * itemsize
    lead = 1
    for d in shape[:-2]:
        lead *= int(d)
    return lead * _round_up(int(shape[-2]), 8) * _round_up(int(shape[-1]), 128) * itemsize


def _vmem_budget():
    try:
        cap = int(pltpu.get_tpu_info().vmem_capacity_bytes)
    except Exception:
        cap = 128 * 1024 * 1024  # assume v5e/v6e if the query is unavailable
    return min(int(0.85 * cap), 100 * 1024 * 1024)


# ---------------- pass 1: fused in-kernel im2col + conv + BN partial stats ----------
def _conv_stats_kernel(x_ref, w_ref, mask_ref, conv_ref, stats_ref, *,
                       K, S, Cin, th, Wo_pad):
    # x_ref    : (Hq, Wq, S*S*Cin)  phase-decomposed padded image (resident per n)
    # w_ref    : (K*K, Cout, Cin)   resident weight, tap-major
    # mask_ref : (1, T)             1.0 for valid output positions, 0.0 for padding
    # conv_ref : (Cout, T)          lane-dense conv tile (T = th * Wo_pad)
    # stats_ref: (Cout, 2)          [sum, sum of squares], resident over the hw axis
    Cout, T = conv_ref.shape
    j = pl.program_id(1)
    r0 = j * th

    acc = jnp.zeros((Cout, T), jnp.float32)
    for kh in range(K):
        for kw in range(K):
            phase = (kh % S) * S + (kw % S)
            po = phase * Cin
            kwq = kw // S
            tap = x_ref[pl.ds(r0 + kh // S, th),
                        kwq:kwq + Wo_pad,
                        po:po + Cin]                      # (th, Wo_pad, Cin)
            tap = tap.reshape(th * Wo_pad, Cin)           # cheap: Wo_pad % 8 == 0
            acc = acc + jax.lax.dot_general(
                w_ref[kh * K + kw], tap,
                (((1,), (1,)), ((), ())),                 # (Cout,Cin) @ (T,Cin)^T
                preferred_element_type=jnp.float32)
    conv_ref[...] = acc.astype(conv_ref.dtype)

    @pl.when(j == 0)
    def _():
        stats_ref[...] = jnp.zeros_like(stats_ref)

    acc_m = acc * mask_ref[...]                           # mask padded rows/cols
    s1 = jnp.sum(acc_m, axis=1, keepdims=True)
    s2 = jnp.sum(acc_m * acc_m, axis=1, keepdims=True)
    stats_ref[...] += jnp.concatenate([s1, s2], axis=1)


# ---------------- pass 2: BN affine + ReLU ------------------------------------------
def _bn_relu_kernel(conv_ref, scale_ref, shift_ref, pre_ref, act_ref):
    pre = conv_ref[...].astype(jnp.float32) * scale_ref[...] + shift_ref[...]
    pre_ref[...] = pre.astype(pre_ref.dtype)
    act_ref[...] = jnp.maximum(pre, 0.0).astype(act_ref.dtype)


def _bn_relu_act_kernel(conv_ref, scale_ref, shift_ref, act_ref):
    pre = conv_ref[...].astype(jnp.float32) * scale_ref[...] + shift_ref[...]
    act_ref[...] = jnp.maximum(pre, 0.0).astype(act_ref.dtype)


def conv_bn_relu_pallas(x_nchw, w_oihw, gamma, beta, *, stride, padding,
                        eps=1e-5, tile_hw=2048,
                        compute_dtype=jnp.float32,
                        conv_dtype=jnp.float32,
                        out_dtype=jnp.float32,
                        store_pre=True):
    """Conv2d(no bias) -> BatchNorm2d(training batch stats) -> ReLU.

    Returns (pre_act, act) in NCHW (pre_act is None when store_pre=False).
    compute_dtype / conv_dtype = bfloat16 halve HBM/VMEM traffic on v6e/v7x (BN
    statistics stay f32); f32 defaults preserve exact module numerics.
    """
    N, Cin, H, W = x_nchw.shape
    Cout, Cin_w, K, K2 = w_oihw.shape
    assert Cin == Cin_w and K == K2
    S, P = int(stride), int(padding)
    Ho = (H + 2 * P - K) // S + 1
    Wo = (W + 2 * P - K) // S + 1

    # ---- tiling: th output rows per hw-tile; lane width Wo_pad (mult of 8);
    #      th * Wo_pad is always a multiple of 128 (lane-dense tiles/stores).
    Wo_pad = _round_up(Wo, 8)
    lcm_rows = 128 // math.gcd(Wo_pad, 128)
    th = lcm_rows * max(1, min(tile_hw // (lcm_rows * Wo_pad), _cdiv(Ho, lcm_rows)))
    Ho_pad = _round_up(Ho, th)
    n_t = Ho_pad // th
    T = th * Wo_pad
    HWp = Ho_pad * Wo_pad

    # ---- wrapper glue: zero-pad + stride-phase-decompose x to NHWC-like layout -----
    hk = (K - 1) // S
    Hq, Wq = Ho_pad + hk, Wo_pad + hk
    C2 = S * S * Cin
    Hfull, Wfull = Hq * S, Wq * S
    x = x_nchw.astype(compute_dtype)
    xpad = jnp.pad(x, ((0, 0), (0, 0),
                       (P, max(Hfull - H - P, 0)),
                       (P, max(Wfull - W - P, 0))))[:, :, :Hfull, :Wfull]
    # x_ph[n, i, j, (sh*S+sw)*Cin + c] = xpad[n, c, i*S+sh, j*S+sw]
    x_ph = (xpad.reshape(N, Cin, Hq, S, Wq, S)
                .transpose(0, 2, 4, 3, 5, 1)
                .reshape(N, Hq, Wq, C2))
    # weight: tap-major (K*K, Cout, Cin)
    w_t = (jnp.transpose(w_oihw, (2, 3, 0, 1))
              .reshape(K * K, Cout, Cin).astype(compute_dtype))
    # validity mask over padded output positions (flattened hw), built once on host
    col_ok = jnp.arange(Wo_pad) < Wo
    row_ok = jnp.arange(Ho_pad) < Ho
    mask = (row_ok[:, None] & col_ok[None, :]).reshape(1, HWp).astype(jnp.float32)

    cbytes = jnp.dtype(compute_dtype).itemsize
    vbytes = jnp.dtype(conv_dtype).itemsize
    obytes = jnp.dtype(out_dtype).itemsize
    budget = _vmem_budget()

    # ---- pass 1: conv tiles + fused per-channel partial stats -----------------------
    est1 = (2 * _tiled_bytes((Hq, Wq, C2), cbytes)        # resident image (2 bufs)
            + 2 * _tiled_bytes((K * K, Cout, Cin), cbytes)
            + 2 * _tiled_bytes((Cout, T), vbytes)
            + 2 * _tiled_bytes((1, T), 4)
            + 2 * _tiled_bytes((Cout, 2), 4)
            + 6 * _tiled_bytes((Cout, T), 4)               # f32 acc / temporaries
            + 2 * _tiled_bytes((T, Cin), cbytes))          # tap temporaries
    if est1 > budget:
        raise ValueError(
            f"conv_bn_relu_pallas pass-1 working set ~{est1 >> 20} MiB exceeds the "
            f"VMEM budget {budget >> 20} MiB; lower tile_hw or use bfloat16 operands.")
    vmem1 = int(min(max(int(est1 * 1.5), 16 * 1024 * 1024), budget))

    kern1 = functools.partial(_conv_stats_kernel, K=K, S=S, Cin=Cin, th=th,
                              Wo_pad=Wo_pad)
    conv, stats = pl.pallas_call(
        kern1,
        grid=(N, n_t),
        in_specs=[
            pl.BlockSpec((None, Hq, Wq, C2), lambda n, j: (n, 0, 0, 0)),
            pl.BlockSpec((K * K, Cout, Cin), lambda n, j: (0, 0, 0)),
            pl.BlockSpec((1, T), lambda n, j: (0, j)),
        ],
        out_specs=(
            pl.BlockSpec((None, Cout, T), lambda n, j: (n, 0, j)),
            pl.BlockSpec((None, Cout, 2), lambda n, j: (n, 0, 0)),
        ),
        out_shape=(
            jax.ShapeDtypeStruct((N, Cout, HWp), conv_dtype),
            jax.ShapeDtypeStruct((N, Cout, 2), jnp.float32),
        ),
        compiler_params=pltpu.CompilerParams(
            dimension_semantics=("parallel", "arbitrary"),
            vmem_limit_bytes=vmem1),
    )(x_ph, w_t, mask)

    # ---- tiny scalar glue: finalize BN statistics (f32) ----------------------------
    count = jnp.float32(N * Ho * Wo)
    psum = jnp.sum(stats[:, :, 0], axis=0)
    psq = jnp.sum(stats[:, :, 1], axis=0)
    mean = psum / count
    var = jnp.maximum(psq / count - mean * mean, 0.0)
    inv = jax.lax.rsqrt(var + eps)
    g32 = gamma.astype(jnp.float32)
    scale = (g32 * inv).reshape(Cout, 1)
    shift = (beta.astype(jnp.float32) - mean * g32 * inv).reshape(Cout, 1)

    # ---- pass 2: BN + ReLU (pure streaming, lane-dense) -----------------------------
    n_out = 2 if store_pre else 1
    est2 = (2 * _tiled_bytes((Cout, T), vbytes)
            + 2 * n_out * _tiled_bytes((Cout, T), obytes)
            + 4 * _tiled_bytes((Cout, T), 4)
            + 4 * _tiled_bytes((Cout, 1), 4))
    vmem2 = int(min(max(int(est2 * 1.5), 16 * 1024 * 1024), budget))
    conv_spec = pl.BlockSpec((None, Cout, T), lambda n, j: (n, 0, j))
    vec_spec = pl.BlockSpec((Cout, 1), lambda n, j: (0, 0))
    tile_spec = pl.BlockSpec((None, Cout, T), lambda n, j: (n, 0, j))
    cp2 = pltpu.CompilerParams(dimension_semantics=("parallel", "parallel"),
                               vmem_limit_bytes=vmem2)

    if store_pre:
        pre_p, act_p = pl.pallas_call(
            _bn_relu_kernel, grid=(N, n_t),
            in_specs=[conv_spec, vec_spec, vec_spec],
            out_specs=(tile_spec, tile_spec),
            out_shape=(jax.ShapeDtypeStruct((N, Cout, HWp), out_dtype),
                       jax.ShapeDtypeStruct((N, Cout, HWp), out_dtype)),
            compiler_params=cp2,
        )(conv, scale, shift)
    else:
        pre_p = None
        act_p = pl.pallas_call(
            _bn_relu_act_kernel, grid=(N, n_t),
            in_specs=[conv_spec, vec_spec, vec_spec],
            out_specs=tile_spec,
            out_shape=jax.ShapeDtypeStruct((N, Cout, HWp), out_dtype),
            compiler_params=cp2,
        )(conv, scale, shift)

    def _crop(a):
        return a.reshape(N, Cout, Ho_pad, Wo_pad)[:, :, :Ho, :Wo]

    act = _crop(act_p)
    pre = _crop(pre_p) if store_pre else None
    return pre, act


class ConvBnRelu:
    """JAX/Pallas equivalent of the PyTorch Conv_bn_relu module (training mode)."""

    def __init__(self, inp, oup, kernel, stride, padding, with_feature=True,
                 key=jax.random.PRNGKey(0)):
        self.stride = stride
        self.padding = padding
        self.with_feature = with_feature
        fan_in = inp * kernel * kernel
        self.weight = (jax.random.normal(key, (oup, inp, kernel, kernel),
                                         jnp.float32) / (fan_in ** 0.5))
        self.gamma = jnp.ones((oup,), jnp.float32)   # BN weight init = 1
        self.beta = jnp.zeros((oup,), jnp.float32)   # BN bias init = 0
        # TODO(synk): BN running_mean/running_var buffer updates are not modeled
        # (they do not affect the training-mode forward output).

    def __call__(self, x):
        if isinstance(x, tuple):
            pre_acts, acts, x = x
        else:
            pre_acts, acts, x = [], [], x
        pre, out = conv_bn_relu_pallas(x, self.weight, self.gamma, self.beta,
                                       stride=self.stride, padding=self.padding)
        pre_acts.append(pre)
        acts.append(out)
        if self.with_feature:
            return (pre_acts, acts, out)
        return out


def _reference(x, w, gamma, beta, stride, padding, eps=1e-5):
    conv = jax.lax.conv_general_dilated(
        x.astype(jnp.float32), w.astype(jnp.float32),
        window_strides=(stride, stride),
        padding=((padding, padding), (padding, padding)),
        dimension_numbers=("NCHW", "OIHW", "NCHW"))
    mean = conv.mean(axis=(0, 2, 3), keepdims=True)
    var = ((conv - mean) ** 2).mean(axis=(0, 2, 3), keepdims=True)
    pre = ((conv - mean) / jnp.sqrt(var + eps)
           * gamma.reshape(1, -1, 1, 1) + beta.reshape(1, -1, 1, 1))
    return pre, jnp.maximum(pre, 0.0)


if __name__ == "__main__":
    key = jax.random.PRNGKey(0)
    k_x, k_w = jax.random.split(key)

    # small shapes: batch=2, inp=4, oup=8, spatial=16, 3x3 conv, stride 1, pad 1
    N, Cin, H, W = 2, 4, 16, 16
    Cout, K, stride, padding = 8, 3, 1, 1
    x = jax.random.normal(k_x, (N, Cin, H, W), jnp.float32)

    module = ConvBnRelu(Cin, Cout, K, stride, padding, with_feature=True, key=k_w)
    pre_acts, acts, out = module(x)
    out = jax.block_until_ready(out)

    pre_ref, act_ref = _reference(x, module.weight, module.gamma, module.beta,
                                  stride, padding)
    assert out.shape == (N, Cout, H, W)
    assert jnp.allclose(pre_acts[0], pre_ref, atol=1e-4, rtol=1e-4)
    assert jnp.allclose(acts[0], act_ref, atol=1e-4, rtol=1e-4)
    assert jnp.allclose(out, act_ref, atol=1e-4, rtol=1e-4)

    # stride-2 (phase-decomposed taps) check, f32
    pre2, act2 = conv_bn_relu_pallas(x, module.weight, module.gamma, module.beta,
                                     stride=2, padding=1)
    pre2_ref, act2_ref = _reference(x, module.weight, module.gamma, module.beta, 2, 1)
    assert jnp.allclose(pre2, pre2_ref, atol=1e-4, rtol=1e-4)
    assert jnp.allclose(act2, act2_ref, atol=1e-4, rtol=1e-4)

    # 1x1 conv check, f32
    w1 = jax.random.normal(jax.random.PRNGKey(3), (Cout, Cin, 1, 1), jnp.float32) * 0.5
    pre3, act3 = conv_bn_relu_pallas(x, w1, module.gamma, module.beta,
                                     stride=1, padding=0)
    pre3_ref, act3_ref = _reference(x, w1, module.gamma, module.beta, 1, 0)
    assert jnp.allclose(pre3, pre3_ref, atol=1e-4, rtol=1e-4)
    assert jnp.allclose(act3, act3_ref, atol=1e-4, rtol=1e-4)

    # bf16 matmul operands + bf16 conv intermediate (HBM-traffic option; looser tol)
    pre_b, act_b = conv_bn_relu_pallas(x, module.weight, module.gamma, module.beta,
                                       stride=stride, padding=padding,
                                       compute_dtype=jnp.bfloat16,
                                       conv_dtype=jnp.bfloat16)
    assert jnp.allclose(pre_b, pre_ref, atol=1e-1, rtol=5e-2)
    assert jnp.allclose(act_b, act_ref, atol=1e-1, rtol=5e-2)

    jax.block_until_ready((pre2, act2, pre3, act3, pre_b, act_b))
    print("KERNEL_OK")
</pallas_src>

<mosaic_0001>
module attributes {stable_mosaic.version = 11 : i64} {
  func.func @_conv_stats_kernel(%arg0: i32, %arg1: i32, %arg2: memref<1x18x18x4xf32, #tpu.memory_space<vmem>>, %arg3: memref<9x8x4xf32, #tpu.memory_space<vmem>>, %arg4: memref<1x256xf32, #tpu.memory_space<vmem>>, %arg5: memref<1x8x256xf32, #tpu.memory_space<vmem>>, %arg6: memref<1x8x2xf32, #tpu.memory_space<vmem>>) attributes {dimension_semantics = [#tpu.dimension_semantics<parallel>, #tpu.dimension_semantics<arbitrary>], iteration_bounds = array<i64: 2, 1>, scalar_prefetch = 0 : i64, scratch_operands = 0 : i64, tpu.core_type = #tpu.core_type<tc>, window_params = [{transform_indices = @transform_0, window_bounds = array<i64: 1, 18, 18, 4>}, {pipeline_mode = #tpu.pipeline_mode<synchronous>, transform_indices = @transform_1, window_bounds = array<i64: 9, 8, 4>}, {transform_indices = @transform_2, window_bounds = array<i64: 1, 256>}, {transform_indices = @transform_3, window_bounds = array<i64: 1, 8, 256>}, {transform_indices = @transform_4, window_bounds = array<i64: 1, 8, 2>}]} {
    %c16_i32 = arith.constant 16 : i32
    %0 = arith.muli %arg1, %c16_i32 : i32
    %cst = arith.constant 0.000000e+00 : f32
    %1 = vector.broadcast %cst : f32 to vector<8x256xf32>
    %c0_i32 = arith.constant 0 : i32
    %2 = arith.addi %0, %c0_i32 : i32
    %c0 = arith.constant 0 : index
    %3 = arith.index_cast %2 : i32 to index
    %c0_0 = arith.constant 0 : index
    %c0_1 = arith.constant 0 : index
    %4 = vector.load %arg2[%c0, %3, %c0_0, %c0_1] : memref<1x18x18x4xf32, #tpu.memory_space<vmem>>, vector<1x16x16x4xf32>
    %5 = vector.shape_cast %4 : vector<1x16x16x4xf32> to vector<16x16x4xf32>
    %6 = vector.shape_cast %5 : vector<16x16x4xf32> to vector<256x4xf32>
    %c0_2 = arith.constant 0 : index
    %c0_3 = arith.constant 0 : index
    %c0_4 = arith.constant 0 : index
    %7 = vector.load %arg3[%c0_2, %c0_3, %c0_4] : memref<9x8x4xf32, #tpu.memory_space<vmem>>, vector<1x8x4xf32>
    %8 = vector.shape_cast %7 : vector<1x8x4xf32> to vector<8x4xf32>
    %cst_5 = arith.constant dense<0.000000e+00> : vector<8x256xf32>
    %9 = tpu.matmul %8, %6, %cst_5 {dimension_numbers = #tpu.dot_dimension_numbers<[1], [1], [0], [0], [0, 0, 1, 0], [], []>} : vector<8x4xf32>, vector<256x4xf32>, vector<8x256xf32> -> vector<8x256xf32>
    %10 = arith.addf %1, %9 : vector<8x256xf32>
    %c0_i32_6 = arith.constant 0 : i32
    %11 = arith.addi %0, %c0_i32_6 : i32
    %c0_7 = arith.constant 0 : index
    %12 = arith.index_cast %11 : i32 to index
    %c1 = arith.constant 1 : index
    %c0_8 = arith.constant 0 : index
    %13 = vector.load %arg2[%c0_7, %12, %c1, %c0_8] : memref<1x18x18x4xf32, #tpu.memory_space<vmem>>, vector<1x16x16x4xf32>
    %14 = vector.shape_cast %13 : vector<1x16x16x4xf32> to vector<16x16x4xf32>
    %15 = vector.shape_cast %14 : vector<16x16x4xf32> to vector<256x4xf32>
    %c1_9 = arith.constant 1 : index
    %c0_10 = arith.constant 0 : index
    %c0_11 = arith.constant 0 : index
    %16 = vector.load %arg3[%c1_9, %c0_10, %c0_11] : memref<9x8x4xf32, #tpu.memory_space<vmem>>, vector<1x8x4xf32>
    %17 = vector.shape_cast %16 : vector<1x8x4xf32> to vector<8x4xf32>
    %cst_12 = arith.constant dense<0.000000e+00> : vector<8x256xf32>
    %18 = tpu.matmul %17, %15, %cst_12 {dimension_numbers = #tpu.dot_dimension_numbers<[1], [1], [0], [0], [0, 0, 1, 0], [], []>} : vector<8x4xf32>, vector<256x4xf32>, vector<8x256xf32> -> vector<8x256xf32>
    %19 = arith.addf %10, %18 : vector<8x256xf32>
    %c0_i32_13 = arith.constant 0 : i32
    %20 = arith.addi %0, %c0_i32_13 : i32
    %c0_14 = arith.constant 0 : index
    %21 = arith.index_cast %20 : i32 to index
    %c2 = arith.constant 2 : index
    %c0_15 = arith.constant 0 : index
    %22 = vector.load %arg2[%c0_14, %21, %c2, %c0_15] : memref<1x18x18x4xf32, #tpu.memory_space<vmem>>, vector<1x16x16x4xf32>
    %23 = vector.shape_cast %22 : vector<1x16x16x4xf32> to vector<16x16x4xf32>
    %24 = vector.shape_cast %23 : vector<16x16x4xf32> to vector<256x4xf32>
    %c2_16 = arith.constant 2 : index
    %c0_17 = arith.constant 0 : index
    %c0_18 = arith.constant 0 : index
    %25 = vector.load %arg3[%c2_16, %c0_17, %c0_18] : memref<9x8x4xf32, #tpu.memory_space<vmem>>, vector<1x8x4xf32>
    %26 = vector.shape_cast %25 : vector<1x8x4xf32> to vector<8x4xf32>
    %cst_19 = arith.constant dense<0.000000e+00> : vector<8x256xf32>
    %27 = tpu.matmul %26, %24, %cst_19 {dimension_numbers = #tpu.dot_dimension_numbers<[1], [1], [0], [0], [0, 0, 1, 0], [], []>} : vector<8x4xf32>, vector<256x4xf32>, vector<8x256xf32> -> vector<8x256xf32>
    %28 = arith.addf %19, %27 : vector<8x256xf32>
    %c1_i32 = arith.constant 1 : i32
    %29 = arith.addi %0, %c1_i32 : i32
    %c0_20 = arith.constant 0 : index
    %30 = arith.index_cast %29 : i32 to index
    %c0_21 = arith.constant 0 : index
    %c0_22 = arith.constant 0 : index
    %31 = vector.load %arg2[%c0_20, %30, %c0_21, %c0_22] : memref<1x18x18x4xf32, #tpu.memory_space<vmem>>, vector<1x16x16x4xf32>
    %32 = vector.shape_cast %31 : vector<1x16x16x4xf32> to vector<16x16x4xf32>
    %33 = vector.shape_cast %32 : vector<16x16x4xf32> to vector<256x4xf32>
    %c3 = arith.constant 3 : index
    %c0_23 = arith.constant 0 : index
    %c0_24 = arith.constant 0 : index
    %34 = vector.load %arg3[%c3, %c0_23, %c0_24] : memref<9x8x4xf32, #tpu.memory_space<vmem>>, vector<1x8x4xf32>
    %35 = vector.shape_cast %34 : vector<1x8x4xf32> to vector<8x4xf32>
    %cst_25 = arith.constant dense<0.000000e+00> : vector<8x256xf32>
    %36 = tpu.matmul %35, %33, %cst_25 {dimension_numbers = #tpu.dot_dimension_numbers<[1], [1], [0], [0], [0, 0, 1, 0], [], []>} : vector<8x4xf32>, vector<256x4xf32>, vector<8x256xf32> -> vector<8x256xf32>
    %37 = arith.addf %28, %36 : vector<8x256xf32>
    %c1_i32_26 = arith.constant 1 : i32
    %38 = arith.addi %0, %c1_i32_26 : i32
    %c0_27 = arith.constant 0 : index
    %39 = arith.index_cast %38 : i32 to index
    %c1_28 = arith.constant 1 : index
    %c0_29 = arith.constant 0 : index
    %40 = vector.load %arg2[%c0_27, %39, %c1_28, %c0_29] : memref<1x18x18x4xf32, #tpu.memory_space<vmem>>, vector<1x16x16x4xf32>
    %41 = vector.shape_cast %40 : vector<1x16x16x4xf32> to vector<16x16x4xf32>
    %42 = vector.shape_cast %41 : vector<16x16x4xf32> to vector<256x4xf32>
    %c4 = arith.constant 4 : index
    %c0_30 = arith.constant 0 : index
    %c0_31 = arith.constant 0 : index
    %43 = vector.load %arg3[%c4, %c0_30, %c0_31] : memref<9x8x4xf32, #tpu.memory_space<vmem>>, vector<1x8x4xf32>
    %44 = vector.shape_cast %43 : vector<1x8x4xf32> to vector<8x4xf32>
    %cst_32 = arith.constant dense<0.000000e+00> : vector<8x256xf32>
    %45 = tpu.matmul %44, %42, %cst_32 {dimension_numbers = #tpu.dot_dimension_numbers<[1], [1], [0], [0], [0, 0, 1, 0], [], []>} : vector<8x4xf32>, vector<256x4xf32>, vector<8x256xf32> -> vector<8x256xf32>
    %46 = arith.addf %37, %45 : vector<8x256xf32>
    %c1_i32_33 = arith.constant 1 : i32
    %47 = arith.addi %0, %c1_i32_33 : i32
    %c0_34 = arith.constant 0 : index
    %48 = arith.index_cast %47 : i32 to index
    %c2_35 = arith.constant 2 : index
    %c0_36 = arith.constant 0 : index
    %49 = vector.load %arg2[%c0_34, %48, %c2_35, %c0_36] : memref<1x18x18x4xf32, #tpu.memory_space<vmem>>, vector<1x16x16x4xf32>
    %50 = vector.shape_cast %49 : vector<1x16x16x4xf32> to vector<16x16x4xf32>
    %51 = vector.shape_cast %50 : vector<16x16x4xf32> to vector<256x4xf32>
    %c5 = arith.constant 5 : index
    %c0_37 = arith.constant 0 : index
    %c0_38 = arith.constant 0 : index
    %52 = vector.load %arg3[%c5, %c0_37, %c0_38] : memref<9x8x4xf32, #tpu.memory_space<vmem>>, vector<1x8x4xf32>
    %53 = vector.shape_cast %52 : vector<1x8x4xf32> to vector<8x4xf32>
    %cst_39 = arith.constant dense<0.000000e+00> : vector<8x256xf32>
    %54 = tpu.matmul %53, %51, %cst_39 {dimension_numbers = #tpu.dot_dimension_numbers<[1], [1], [0], [0], [0, 0, 1, 0], [], []>} : vector<8x4xf32>, vector<256x4xf32>, vector<8x256xf32> -> vector<8x256xf32>
    %55 = arith.addf %46, %54 : vector<8x256xf32>
    %c2_i32 = arith.constant 2 : i32
    %56 = arith.addi %0, %c2_i32 : i32
    %c0_40 = arith.constant 0 : index
    %57 = arith.index_cast %56 : i32 to index
    %c0_41 = arith.constant 0 : index
    %c0_42 = arith.constant 0 : index
    %58 = vector.load %arg2[%c0_40, %57, %c0_41, %c0_42] : memref<1x18x18x4xf32, #tpu.memory_space<vmem>>, vector<1x16x16x4xf32>
    %59 = vector.shape_cast %58 : vector<1x16x16x4xf32> to vector<16x16x4xf32>
    %60 = vector.shape_cast %59 : vector<16x16x4xf32> to vector<256x4xf32>
    %c6 = arith.constant 6 : index
    %c0_43 = arith.constant 0 : index
    %c0_44 = arith.constant 0 : index
    %61 = vector.load %arg3[%c6, %c0_43, %c0_44] : memref<9x8x4xf32, #tpu.memory_space<vmem>>, vector<1x8x4xf32>
    %62 = vector.shape_cast %61 : vector<1x8x4xf32> to vector<8x4xf32>
    %cst_45 = arith.constant dense<0.000000e+00> : vector<8x256xf32>
    %63 = tpu.matmul %62, %60, %cst_45 {dimension_numbers = #tpu.dot_dimension_numbers<[1], [1], [0], [0], [0, 0, 1, 0], [], []>} : vector<8x4xf32>, vector<256x4xf32>, vector<8x256xf32> -> vector<8x256xf32>
    %64 = arith.addf %55, %63 : vector<8x256xf32>
    %c2_i32_46 = arith.constant 2 : i32
    %65 = arith.addi %0, %c2_i32_46 : i32
    %c0_47 = arith.constant 0 : index
    %66 = arith.index_cast %65 : i32 to index
    %c1_48 = arith.constant 1 : index
    %c0_49 = arith.constant 0 : index
    %67 = vector.load %arg2[%c0_47, %66, %c1_48, %c0_49] : memref<1x18x18x4xf32, #tpu.memory_space<vmem>>, vector<1x16x16x4xf32>
    %68 = vector.shape_cast %67 : vector<1x16x16x4xf32> to vector<16x16x4xf32>
    %69 = vector.shape_cast %68 : vector<16x16x4xf32> to vector<256x4xf32>
    %c7 = arith.constant 7 : index
    %c0_50 = arith.constant 0 : index
    %c0_51 = arith.constant 0 : index
    %70 = vector.load %arg3[%c7, %c0_50, %c0_51] : memref<9x8x4xf32, #tpu.memory_space<vmem>>, vector<1x8x4xf32>
    %71 = vector.shape_cast %70 : vector<1x8x4xf32> to vector<8x4xf32>
    %cst_52 = arith.constant dense<0.000000e+00> : vector<8x256xf32>
    %72 = tpu.matmul %71, %69, %cst_52 {dimension_numbers = #tpu.dot_dimension_numbers<[1], [1], [0], [0], [0, 0, 1, 0], [], []>} : vector<8x4xf32>, vector<256x4xf32>, vector<8x256xf32> -> vector<8x256xf32>
    %73 = arith.addf %64, %72 : vector<8x256xf32>
    %c2_i32_53 = arith.constant 2 : i32
    %74 = arith.addi %0, %c2_i32_53 : i32
    %c0_54 = arith.constant 0 : index
    %75 = arith.index_cast %74 : i32 to index
    %c2_55 = arith.constant 2 : index
    %c0_56 = arith.constant 0 : index
    %76 = vector.load %arg2[%c0_54, %75, %c2_55, %c0_56] : memref<1x18x18x4xf32, #tpu.memory_space<vmem>>, vector<1x16x16x4xf32>
    %77 = vector.shape_cast %76 : vector<1x16x16x4xf32> to vector<16x16x4xf32>
    %78 = vector.shape_cast %77 : vector<16x16x4xf32> to vector<256x4xf32>
    %c8 = arith.constant 8 : index
    %c0_57 = arith.constant 0 : index
    %c0_58 = arith.constant 0 : index
    %79 = vector.load %arg3[%c8, %c0_57, %c0_58] : memref<9x8x4xf32, #tpu.memory_space<vmem>>, vector<1x8x4xf32>
    %80 = vector.shape_cast %79 : vector<1x8x4xf32> to vector<8x4xf32>
    %cst_59 = arith.constant dense<0.000000e+00> : vector<8x256xf32>
    %81 = tpu.matmul %80, %78, %cst_59 {dimension_numbers = #tpu.dot_dimension_numbers<[1], [1], [0], [0], [0, 0, 1, 0], [], []>} : vector<8x4xf32>, vector<256x4xf32>, vector<8x256xf32> -> vector<8x256xf32>
    %82 = arith.addf %73, %81 : vector<8x256xf32>
    %c0_60 = arith.constant 0 : index
    %c0_61 = arith.constant 0 : index
    %c0_62 = arith.constant 0 : index
    %83 = vector.load %arg5[%c0_60, %c0_61, %c0_62] : memref<1x8x256xf32, #tpu.memory_space<vmem>>, vector<1x8x256xf32>
    %84 = vector.shape_cast %83 : vector<1x8x256xf32> to vector<8x256xf32>
    %85 = vector.shape_cast %82 : vector<8x256xf32> to vector<1x8x256xf32>
    tpu.vector_store %arg5[%c0_60, %c0_61, %c0_62], %85 {strides = array<i32>} : memref<1x8x256xf32, #tpu.memory_space<vmem>>, vector<1x8x256xf32>,
    %c0_i32_63 = arith.constant 0 : i32
    %86 = arith.cmpi eq, %arg1, %c0_i32_63 : i32
    %87 = arith.extui %86 : i1 to i32
    %c0_i32_64 = arith.constant 0 : i32
    %88 = arith.cmpi ne, %87, %c0_i32_64 : i32
    scf.if %88 {
      %cst_75 = arith.constant 0.000000e+00 : f32
      %104 = vector.broadcast %cst_75 : f32 to vector<8x2xf32>
      %c0_76 = arith.constant 0 : index
      %c0_77 = arith.constant 0 : index
      %c0_78 = arith.constant 0 : index
      %105 = vector.load %arg6[%c0_76, %c0_77, %c0_78] : memref<1x8x2xf32, #tpu.memory_space<vmem>>, vector<1x8x2xf32>
      %106 = vector.shape_cast %105 : vector<1x8x2xf32> to vector<8x2xf32>
      %107 = vector.shape_cast %104 : vector<8x2xf32> to vector<1x8x2xf32>
      tpu.vector_store %arg6[%c0_76, %c0_77, %c0_78], %107 {strides = array<i32>} : memref<1x8x2xf32, #tpu.memory_space<vmem>>, vector<1x8x2xf32>,
    } else {
    }
    %c0_65 = arith.constant 0 : index
    %c0_66 = arith.constant 0 : index
    %89 = vector.load %arg4[%c0_65, %c0_66] : memref<1x256xf32, #tpu.memory_space<vmem>>, vector<1x256xf32>
    %90 = vector.broadcast %89 : vector<1x256xf32> to vector<8x256xf32>
    %91 = arith.mulf %82, %90 : vector<8x256xf32>
    %cst_67 = arith.constant dense<0.000000e+00> : vector<8xf32>
    %92 = vector.multi_reduction <add>, %91, %cst_67 [1] : vector<8x256xf32> to vector<8xf32>
    %93 = vector.shape_cast %92 : vector<8xf32> to vector<8x1xf32>
    %94 = arith.mulf %91, %91 : vector<8x256xf32>
    %cst_68 = arith.constant dense<0.000000e+00> : vector<8xf32>
    %95 = vector.multi_reduction <add>, %94, %cst_68 [1] : vector<8x256xf32> to vector<8xf32>
    %96 = vector.shape_cast %95 : vector<8xf32> to vector<8x1xf32>
    %c0_69 = arith.constant 0 : index
    %c0_70 = arith.constant 0 : index
    %c0_71 = arith.constant 0 : index
    %97 = vector.load %arg6[%c0_69, %c0_70, %c0_71] : memref<1x8x2xf32, #tpu.memory_space<vmem>>, vector<1x8x2xf32>
    %98 = vector.shape_cast %97 : vector<1x8x2xf32> to vector<8x2xf32>
    %99 = tpu.concatenate %93, %96 in 1 : vector<8x1xf32>, vector<8x1xf32> -> vector<8x2xf32>
    %100 = arith.addf %98, %99 : vector<8x2xf32>
    %c0_72 = arith.constant 0 : index
    %c0_73 = arith.constant 0 : index
    %c0_74 = arith.constant 0 : index
    %101 = vector.load %arg6[%c0_72, %c0_73, %c0_74] : memref<1x8x2xf32, #tpu.memory_space<vmem>>, vector<1x8x2xf32>
    %102 = vector.shape_cast %101 : vector<1x8x2xf32> to vector<8x2xf32>
    %103 = vector.shape_cast %100 : vector<8x2xf32> to vector<1x8x2xf32>
    tpu.vector_store %arg6[%c0_72, %c0_73, %c0_74], %103 {strides = array<i32>} : memref<1x8x2xf32, #tpu.memory_space<vmem>>, vector<1x8x2xf32>,
    return
  }
  func.func @transform_0(%arg0: i32, %arg1: i32) -> (i32, i32, i32, i32) {
    %c0_i32 = arith.constant 0 : i32
    %c0_i32_0 = arith.constant 0 : i32
    %c0_i32_1 = arith.constant 0 : i32
    %c0_i32_2 = arith.constant 0 : i32
    return %arg0, %c0_i32, %c0_i32_0, %c0_i32_1 : i32, i32, i32, i32
  }
  func.func @transform_1(%arg0: i32, %arg1: i32) -> (i32, i32, i32) {
    %c0_i32 = arith.constant 0 : i32
    %c0_i32_0 = arith.constant 0 : i32
    %c0_i32_1 = arith.constant 0 : i32
    %c0_i32_2 = arith.constant 0 : i32
    return %c0_i32, %c0_i32_0, %c0_i32_1 : i32, i32, i32
  }
  func.func @transform_2(%arg0: i32, %arg1: i32) -> (i32, i32) {
    %c0_i32 = arith.constant 0 : i32
    %c0_i32_0 = arith.constant 0 : i32
    return %c0_i32, %arg1 : i32, i32
  }
  func.func @transform_3(%arg0: i32, %arg1: i32) -> (i32, i32, i32) {
    %c0_i32 = arith.constant 0 : i32
    %c0_i32_0 = arith.constant 0 : i32
    return %arg0, %c0_i32, %arg1 : i32, i32, i32
  }
  func.func @transform_4(%arg0: i32, %arg1: i32) -> (i32, i32, i32) {
    %c0_i32 = arith.constant 0 : i32
    %c0_i32_0 = arith.constant 0 : i32
    %c0_i32_1 = arith.constant 0 : i32
    return %arg0, %c0_i32, %c0_i32_0 : i32, i32, i32
  }
}

</mosaic_0001>

<llo_original>
// kernel: tpu_custom_call.1
$region0: #{tpu_custom_call.1}
  #allocation0 [shape = 'u32[]', space=smem, size = 0x4, offset = 0x4, fixed_abs, tag = 'smem constant byte address 0x4 - core index']
  #allocation1 [shape = 'u32[144,128]{1,0:T(1,128)}', space=vmem, size = 0x12000, scoped, tag = 'internal scratch']
  %s0 = inlined_call_operand.vmem [shape: f32[2,18,18,4], index: 0, kind: input, shape index: {}]
  %s1 = inlined_call_operand.vmem [shape: f32[9,8,4], index: 1, kind: input, shape index: {}]
  %s2 = inlined_call_operand.vmem [shape: f32[1,256], index: 2, kind: input, shape index: {}]
  %s3 = inlined_call_operand.hbm [shape: f32[2,8,256], index: 3, kind: output, shape index: {0}]
  %s4 = inlined_call_operand.vmem [shape: f32[2,8,2], index: 4, kind: output, shape index: {1}]
  %5 = xla_tuple %s3, %s4
  %s6 = sld [smem:[#allocation0]]
  $region57: #{tpu_custom_call.1} parent=0
    _
  %s8 = ssub.s32 1, %s6
  %s9 = scalar_select 0, %s8, %s6
  $region1: #{tpu_custom_call.1} parent=0
    #allocation2 [shape = 'u8[16384]{0}', space=vmem, size = 0x4000, scoped, tag = 'output window, operand 0']
    #allocation3 [shape = 's32[2]{0}', space=sflag, size = 0x8, scoped, tag = 'scoped memory for tpu_custom_call.1']
    %10 = vsyncpa [#allocation3], 0
    %s11 = scalar_lea.sflag [#allocation3], 1
    %12 = vsyncpa %s11, 0
    loop: start=0, step=1, limit=4
    $region2: #{tpu_custom_call.1} parent=1 // loop_pre_header
      _
    $region3: #{tpu_custom_call.1} parent=1 // loop_header
      %s14 = sphi 0, %s18
      %p15 = scmp.ge.s32.totalorder %s14, 4
      %s21 = sphi 0, %s33
      %s22 = sphi 0, %s29
      %s23 = sphi 0, %s21
      %s24 = sphi 0, %s22
      %s25 = sphi 0, %s23
      %s26 = sphi 0, %s24
      %s36 = sphi 0, %s38
      %s39 = sphi 0, %s36
      %s40 = sphi 0, %s39
      %s56 = sphi 0, %s40
      %s60 = sphi 0, %s60
      %s62 = sphi 0, %s60
      %s63 = sphi 0, %s62
      %s77 = sphi 0, %s63
      %s83 = sphi 0, %s85
      %s86 = sphi 0, %s83
      %s87 = sphi 0, %s86
      %s103 = sphi 0, %s87
      %s111 = sphi 0, %s113
      %s114 = sphi 0, %s111
      %s115 = sphi 0, %s114
      %s131 = sphi 0, %s115
      %s137 = sphi 0, %s139
      %s140 = sphi 0, %s137
      %s141 = sphi 0, %s140
      %s157 = sphi 0, %s141
    $region4: #{tpu_custom_call.1} parent=1 // loop_header_branch
      %17 = sbr.rel (%p15) target = $region8
    $region5: #{tpu_custom_call.1} parent=1 // loop_body
      %s19 = ssub.s32 %s14, 1
      %s20 = ssub.s32 %s14, 2
      %s27 = sadd.s32 1, %s22
      %p28 = scmp.ge.s32.totalorder %s27, 1
      %s29 = scalar_select %p28, 0, %s27
      %s30 = sadd.s32 1, %s21
      %s31 = scalar_select %p28, %s30, %s21
      %p32 = scmp.ge.s32.totalorder %s31, 2
      %s33 = scalar_select %p32, 0, %s31
      %s34 = ssub.s32 %s21, %s33
      %p35 = scmp.eq.s32.totalorder %s34, 0
      %s37 = sadd.s32 %s36, 1
      %s38 = scalar_select %p35, %s36, %s37
      %p41 = pneg %p35
      %p42 = scmp.eq.s32.totalorder %s14, 1
      %p43 = por %p41, %p42
      %p44 = scmp.ne.s32.totalorder %s36, %s39
      %p45 = scmp.eq.s32.totalorder %s14, 0
      %p46 = por %p44, %p45
      %p47 = scmp.ne.s32.totalorder %s36, %s39
      %p48 = scmp.eq.s32.totalorder %s19, 1
      %p49 = por %p47, %p48
      %p50 = scmp.ne.s32.totalorder %s39, %s40
      %p51 = scmp.eq.s32.totalorder %s19, 0
      %p52 = por %p50, %p51
      %p53 = scmp.ne.s32.totalorder %s39, %s40
      %p54 = scmp.eq.s32.totalorder %s20, 1
      %p55 = por %p53, %p54
      %p57 = scmp.ne.s32.totalorder %s40, %s56
      %p58 = scmp.eq.s32.totalorder %s20, 0
      %p59 = por %p57, %p58
      %s61 = sadd.s32 %s60, 1
      %p64 = scmp.eq.s32.totalorder %s14, 1
      %p65 = scmp.ne.s32.totalorder %s60, %s62
      %p66 = scmp.eq.s32.totalorder %s14, 0
      %p67 = por %p65, %p66
      %p68 = scmp.ne.s32.totalorder %s60, %s62
      %p69 = scmp.eq.s32.totalorder %s19, 1
      %p70 = por %p68, %p69
      %p71 = scmp.ne.s32.totalorder %s62, %s63
      %p72 = scmp.eq.s32.totalorder %s19, 0
      %p73 = por %p71, %p72
      %p74 = scmp.ne.s32.totalorder %s62, %s63
      %p75 = scmp.eq.s32.totalorder %s20, 1
      %p76 = por %p74, %p75
      %p78 = scmp.ne.s32.totalorder %s63, %s77
      %p79 = scmp.eq.s32.totalorder %s20, 0
      %p80 = por %p78, %p79
      %s81 = ssub.s32 %s22, %s29
      %p82 = scmp.eq.s32.totalorder %s81, 0
      %s84 = sadd.s32 %s83, 1
      %s85 = scalar_select %p82, %s83, %s84
      %p88 = pneg %p82
      %p89 = scmp.eq.s32.totalorder %s14, 1
      %p90 = por %p88, %p89
      %p91 = scmp.ne.s32.totalorder %s83, %s86
      %p92 = scmp.eq.s32.totalorder %s14, 0
      %p93 = por %p91, %p92
      %p94 = scmp.ne.s32.totalorder %s83, %s86
      %p95 = scmp.eq.s32.totalorder %s19, 1
      %p96 = por %p94, %p95
      %p97 = scmp.ne.s32.totalorder %s86, %s87
      %p98 = scmp.eq.s32.totalorder %s19, 0
      %p99 = por %p97, %p98
      %p100 = scmp.ne.s32.totalorder %s86, %s87
      %p101 = scmp.eq.s32.totalorder %s20, 1
      %p102 = por %p100, %p101
      %p104 = scmp.ne.s32.totalorder %s87, %s103
      %p105 = scmp.eq.s32.totalorder %s20, 0
      %p106 = por %p104, %p105
      %s107 = ssub.s32 %s21, %s33
      %s108 = ssub.s32 %s22, %s29
      %s109 = sor.u32 %s107, %s108
      %p110 = scmp.eq.s32.totalorder %s109, 0
      %s112 = sadd.s32 %s111, 1
      %s113 = scalar_select %p110, %s111, %s112
      %p116 = pneg %p110
      %p117 = scmp.eq.s32.totalorder %s14, 1
      %p118 = por %p116, %p117
      %p119 = scmp.ne.s32.totalorder %s111, %s114
      %p120 = scmp.eq.s32.totalorder %s14, 0
      %p121 = por %p119, %p120
      %p122 = scmp.ne.s32.totalorder %s111, %s114
      %p123 = scmp.eq.s32.totalorder %s19, 1
      %p124 = por %p122, %p123
      %p125 = scmp.ne.s32.totalorder %s114, %s115
      %p126 = scmp.eq.s32.totalorder %s19, 0
      %p127 = por %p125, %p126
      %p128 = scmp.ne.s32.totalorder %s114, %s115
      %p129 = scmp.eq.s32.totalorder %s20, 1
      %p130 = por %p128, %p129
      %p132 = scmp.ne.s32.totalorder %s115, %s131
      %p133 = scmp.eq.s32.totalorder %s20, 0
      %p134 = por %p132, %p133
      %s135 = ssub.s32 %s21, %s33
      %p136 = scmp.eq.s32.totalorder %s135, 0
      %s138 = sadd.s32 %s137, 1
      %s139 = scalar_select %p136, %s137, %s138
      %p142 = pneg %p136
      %p143 = scmp.eq.s32.totalorder %s14, 1
      %p144 = por %p142, %p143
      %p145 = scmp.ne.s32.totalorder %s137, %s140
      %p146 = scmp.eq.s32.totalorder %s14, 0
      %p147 = por %p145, %p146
      %p148 = scmp.ne.s32.totalorder %s137, %s140
      %p149 = scmp.eq.s32.totalorder %s19, 1
      %p150 = por %p148, %p149
      %p151 = scmp.ne.s32.totalorder %s140, %s141
      %p152 = scmp.eq.s32.totalorder %s19, 0
      %p153 = por %p151, %p152
      %p154 = scmp.ne.s32.totalorder %s140, %s141
      %p155 = scmp.eq.s32.totalorder %s20, 1
      %p156 = por %p154, %p155
      %p158 = scmp.ne.s32.totalorder %s141, %s157
      %p159 = scmp.eq.s32.totalorder %s20, 0
      %p160 = por %p158, %p159
      %p161 = scmp.le.s32.totalorder 1, %s14
      %p162 = scmp.lt.s32.totalorder %s14, 3
      %p163 = pnand %p161, %p162
      %p164 = pneg %p163
      // Predicated region
      $region9: #{tpu_custom_call.1} parent=5 // pred_check
        _
      $region10: #{tpu_custom_call.1} parent=5 // pred_check_branch
        %166 = sbr.rel (%p163) target = $region12
      $region11: #{tpu_custom_call.1} parent=5 // pred_region
        %s167 = ssub.s32 %s14, 1
        // Predicated region
        $region13: #{tpu_custom_call.1} parent=11 // pred_check
          %p168 = pneg %p73
        $region14: #{tpu_custom_call.1} parent=11 // pred_check_branch
          %170 = sbr.rel (%p168) target = $region16
        $region15: #{tpu_custom_call.1} parent=11 // pred_region
          _
        $region16: #{tpu_custom_call.1} parent=11 // pred_fallthru
          _
        // Predicated region
        $region17: #{tpu_custom_call.1} parent=11 // pred_check
          %p171 = pneg %p99
        $region18: #{tpu_custom_call.1} parent=11 // pred_check_branch
          %173 = sbr.rel (%p171) target = $region20
        $region19: #{tpu_custom_call.1} parent=11 // pred_region
          %s174 = smul.u32 2, %s24
          %p175 = scmp.lt.s32.totalorder %s174, 1
          %s176 = scalar_select %p175, %s174, 1
          %s177 = scalar_lea.vmem %s2, %s176
          %s178 = smul.u32 2, %s24
        $region20: #{tpu_custom_call.1} parent=11 // pred_fallthru
          _
      $region12: #{tpu_custom_call.1} parent=5 // pred_fallthru
        _
      %p179 = scmp.lt.s32.totalorder %s14, 2
      // Predicated region
      $region21: #{tpu_custom_call.1} parent=5 // pred_check
        %p180 = pneg %p179
      $region22: #{tpu_custom_call.1} parent=5 // pred_check_branch
        %182 = sbr.rel (%p180) target = $region24
      $region23: #{tpu_custom_call.1} parent=5 // pred_region
        // Predicated region
        $region25: #{tpu_custom_call.1} parent=23 // pred_check
          %p183 = pneg %p46
        $region26: #{tpu_custom_call.1} parent=23 // pred_check_branch
          %185 = sbr.rel (%p183) target = $region28
        $region27: #{tpu_custom_call.1} parent=23 // pred_region
          %p186 = scmp.lt.s32.totalorder %s21, 1
          %s187 = scalar_select %p186, %s21, 1
          %s188 = smul.addr %s187, 54
          %s189 = smul.addr %s188, 8
          %s190 = scalar_lea.vmem %s0, %s189
        $region28: #{tpu_custom_call.1} parent=23 // pred_fallthru
          _
      $region24: #{tpu_custom_call.1} parent=5 // pred_fallthru
        _
      %p191 = scmp.le.s32.totalorder 1, %s14
      %p192 = scmp.lt.s32.totalorder %s14, 3
      %p193 = pnand %p191, %p192
      %p194 = pneg %p193
      // Predicated region
      $region29: #{tpu_custom_call.1} parent=5 // pred_check
        _
      $region30: #{tpu_custom_call.1} parent=5 // pred_check_branch
        %196 = sbr.rel (%p193) target = $region32
      $region31: #{tpu_custom_call.1} parent=5 // pred_region
        %s197 = ssub.s32 %s14, 1
        %p198 = scmp.lt.s32.totalorder %s23, 1
        %s199 = scalar_select %p198, %s23, 1
        %s200 = smul.addr %s199, 54
        %s201 = smul.addr %s200, 8
        %s202 = scalar_lea.vmem %s0, %s201
        %p203 = pneg %p52
        %p204 = pneg %p49
        %p205 = pneg %p73
        %p206 = pneg %p70
        %s207 = smul.u32 2, %s24
        %p208 = scmp.lt.s32.totalorder %s207, 1
        %s209 = scalar_select %p208, %s207, 1
        %s210 = scalar_lea.vmem %s2, %s209
        %p211 = pneg %p99
        %p212 = pneg %p96
        %p213 = pneg %p127
        %p214 = pneg %p124
        %s215 = sand.u32 %s114, 1
        %s216 = scalar_lea.sflag [#allocation3], %s215
        %s217 = sand.u32 %s114, 1
        %s218 = smul.addr %s217, 16
        %s219 = scalar_lea.vmem [#allocation2], %s218
        %p220 = pneg %p153
        %p221 = pneg %p150
        %p222 = scmp.lt.s32.totalorder %s23, 1
        %s223 = scalar_select %p222, %s23, 1
        %s224 = smul.addr %s223, 8
        %s225 = scalar_lea.vmem %s4, %s224
        %p226 = scmp.lt.s32.totalorder %s23, 1
        %s227 = scalar_select %p226, %s23, 1
        %s228 = smul.addr %s227, 54
        %s229 = smul.addr %s228, 8
        %s230 = scalar_lea.vmem %s0, %s229
        %s231 = smul.u32 2, %s24
        %p232 = scmp.lt.s32.totalorder %s231, 1
        %s233 = scalar_select %p232, %s231, 1
        %s234 = scalar_lea.vmem %s2, %s233
        %s235 = smul.u32 2, %s24
        %s236 = smul.u32 2, %s24
        %p237 = scmp.lt.s32.totalorder %s23, 1
        %s238 = scalar_select %p237, %s23, 1
        %s239 = smul.addr %s238, 8
        %s240 = scalar_lea.vmem %s4, %s239
        %s241 = smul.u32 %s24, 16
        %s242 = smul.u32 %s241, 24
        %s243 = scalar_lea.vmem %s230, %s242
        %v244 = vld [vmem:[%s243] sm:$0xff]
        %v245 = vld [vmem:[%s243 + $0x8] sm:$0xff]
        %v246 = vld [vmem:[%s243 + $0x18] sm:$0xff]
        %v247 = vld [vmem:[%s243 + $0x20] sm:$0xff]
        %v248 = vld [vmem:[%s243 + $0x30] sm:$0xff]
        %v249 = vld [vmem:[%s243 + $0x38] sm:$0xff]
        %v250 = vld [vmem:[%s243 + $0x48] sm:$0xff]
        %v251 = vld [vmem:[%s243 + $0x50] sm:$0xff]
        %v252 = vld [vmem:[%s243 + $0x60] sm:$0xff]
        %v253 = vld [vmem:[%s243 + $0x68] sm:$0xff]
        %v254 = vld [vmem:[%s243 + $0x78] sm:$0xff]
        %v255 = vld [vmem:[%s243 + $0x80] sm:$0xff]
        %v256 = vld [vmem:[%s243 + $0x90] sm:$0xff]
        %v257 = vld [vmem:[%s243 + $0x98] sm:$0xff]
        %v258 = vld [vmem:[%s243 + $0xa8] sm:$0xff]
        %v259 = vld [vmem:[%s243 + $0xb0] sm:$0xff]
        %v260 = vld [vmem:[%s243 + $0xc0] sm:$0xff]
        %v261 = vld [vmem:[%s243 + $0xc8] sm:$0xff]
        %v262 = vld [vmem:[%s243 + $0xd8] sm:$0xff]
        %v263 = vld [vmem:[%s243 + $0xe0] sm:$0xff]
        %v264 = vld [vmem:[%s243 + $0xf0] sm:$0xff]
        %v265 = vld [vmem:[%s243 + $0xf8] sm:$0xff]
        %v266 = vld [vmem:[%s243 + $0x108] sm:$0xff]
        %v267 = vld [vmem:[%s243 + $0x110] sm:$0xff]
        %v268 = vld [vmem:[%s243 + $0x120] sm:$0xff]
        %v269 = vld [vmem:[%s243 + $0x128] sm:$0xff]
        %v270 = vld [vmem:[%s243 + $0x138] sm:$0xff]
        %v271 = vld [vmem:[%s243 + $0x140] sm:$0xff]
        %v272 = vld [vmem:[%s243 + $0x150] sm:$0xff]
        %v273 = vld [vmem:[%s243 + $0x158] sm:$0xff]
        %v274 = vld [vmem:[%s243 + $0x168] sm:$0xff]
        %v275 = vld [vmem:[%s243 + $0x170] sm:$0xff]
        %v276 = vld [vmem:[%s1] sm:$0xff]
        %v277 = vld [vmem:[%s243 + $0x1] sm:$0xff]
        %v278 = vld [vmem:[%s243 + $0x9] sm:$0xff]
        %v279 = vld [vmem:[%s243 + $0x19] sm:$0xff]
        %v280 = vld [vmem:[%s243 + $0x21] sm:$0xff]
        %v281 = vld [vmem:[%s243 + $0x31] sm:$0xff]
        %v282 = vld [vmem:[%s243 + $0x39] sm:$0xff]
        %v283 = vld [vmem:[%s243 + $0x49] sm:$0xff]
        %v284 = vld [vmem:[%s243 + $0x51] sm:$0xff]
        %v285 = vld [vmem:[%s243 + $0x61] sm:$0xff]
        %v286 = vld [vmem:[%s243 + $0x69] sm:$0xff]
        %v287 = vld [vmem:[%s243 + $0x79] sm:$0xff]
        %v288 = vld [vmem:[%s243 + $0x81] sm:$0xff]
        %v289 = vld [vmem:[%s243 + $0x91] sm:$0xff]
        %v290 = vld [vmem:[%s243 + $0x99] sm:$0xff]
        %v291 = vld [vmem:[%s243 + $0xa9] sm:$0xff]
        %v292 = vld [vmem:[%s243 + $0xb1] sm:$0xff]
        %v293 = vld [vmem:[%s243 + $0xc1] sm:$0xff]
        %v294 = vld [vmem:[%s243 + $0xc9] sm:$0xff]
        %v295 = vld [vmem:[%s243 + $0xd9] sm:$0xff]
        %v296 = vld [vmem:[%s243 + $0xe1] sm:$0xff]
        %v297 = vld [vmem:[%s243 + $0xf1] sm:$0xff]
        %v298 = vld [vmem:[%s243 + $0xf9] sm:$0xff]
        %v299 = vld [vmem:[%s243 + $0x109] sm:$0xff]
        %v300 = vld [vmem:[%s243 + $0x111] sm:$0xff]
        %v301 = vld [vmem:[%s243 + $0x121] sm:$0xff]
        %v302 = vld [vmem:[%s243 + $0x129] sm:$0xff]
        %v303 = vld [vmem:[%s243 + $0x139] sm:$0xff]
        %v304 = vld [vmem:[%s243 + $0x141] sm:$0xff]
        %v305 = vld [vmem:[%s243 + $0x151] sm:$0xff]
        %v306 = vld [vmem:[%s243 + $0x159] sm:$0xff]
        %v307 = vld [vmem:[%s243 + $0x169] sm:$0xff]
        %v308 = vld [vmem:[%s243 + $0x171] sm:$0xff]
        %s309 = scalar_lea.vmem %s1, 8
        %v310 = vld [vmem:[%s309] sm:$0xff]
        %vm311 = vcmask 31744
        %v313 = vsel %vm311, %v310, 0
        %v316 = vsel %vm311, %v277, 0
        %v319 = vsel %vm311, %v278, 0
        %v322 = vsel %vm311, %v279, 0
        %v325 = vsel %vm311, %v280, 0
        %v328 = vsel %vm311, %v281, 0
        %v331 = vsel %vm311, %v282, 0
        %v334 = vsel %vm311, %v283, 0
        %v337 = vsel %vm311, %v284, 0
        %v340 = vsel %vm311, %v285, 0
        %v343 = vsel %vm311, %v286, 0
        %v346 = vsel %vm311, %v287, 0
        %v349 = vsel %vm311, %v288, 0
        %v352 = vsel %vm311, %v289, 0
        %v355 = vsel %vm311, %v290, 0
        %v358 = vsel %vm311, %v291, 0
        %v361 = vsel %vm311, %v292, 0
        %v364 = vsel %vm311, %v293, 0
        %v367 = vsel %vm311, %v294, 0
        %v370 = vsel %vm311, %v295, 0
        %v373 = vsel %vm311, %v296, 0
        %v376 = vsel %vm311, %v297, 0
        %v379 = vsel %vm311, %v298, 0
        %v382 = vsel %vm311, %v299, 0
        %v385 = vsel %vm311, %v300, 0
        %v388 = vsel %vm311, %v301, 0
        %v391 = vsel %vm311, %v302, 0
        %v394 = vsel %vm311, %v303, 0
        %v397 = vsel %vm311, %v304, 0
        %v400 = vsel %vm311, %v305, 0
        %v403 = vsel %vm311, %v306, 0
        %v406 = vsel %vm311, %v307, 0
        %v409 = vsel %vm311, %v308, 0
        %411 = vmatprep.subr.mxu0 0.0
        %412 = vmatpush1.xpose.msra.mxu0 %v361
        %413 = vmatprep.subr.mxu0 0.0
        %414 = vmatpush1.xpose.msra.mxu0 %v358
        %415 = vmatprep.subr.mxu0 0.0
        %416 = vmatpush1.xpose.msra.mxu0 %v355
        %417 = vmatprep.subr.mxu0 0.0
        %418 = vmatpush1.xpose.msra.mxu0 %v352
        %419 = vmatprep.subr.mxu0 0.0
        %420 = vmatpush1.xpose.msra.mxu0 %v349
        %421 = vmatprep.subr.mxu0 0.0
        %422 = vmatpush1.xpose.msra.mxu0 %v346
        %423 = vmatprep.subr.mxu0 0.0
        %424 = vmatpush1.xpose.msra.mxu0 %v343
        %425 = vmatprep.subr.mxu0 0.0
        %426 = vmatpush1.xpose.msra.mxu0 %v340
        %427 = vmatprep.subr.mxu0 0.0
        %428 = vmatpush1.xpose.msra.mxu0 %v337
        %429 = vmatprep.subr.mxu0 0.0
        %430 = vmatpush1.xpose.msra.mxu0 %v334
        %431 = vmatprep.subr.mxu0 0.0
        %432 = vmatpush1.xpose.msra.mxu0 %v331
        %433 = vmatprep.subr.mxu0 0.0
        %434 = vmatpush1.xpose.msra.mxu0 %v328
        %435 = vmatprep.subr.mxu0 0.0
        %436 = vmatpush1.xpose.msra.mxu0 %v325
        %437 = vmatprep.subr.mxu0 0.0
        %438 = vmatpush1.xpose.msra.mxu0 %v322
        %439 = vmatprep.subr.mxu0 0.0
        %440 = vmatpush1.xpose.msra.mxu0 %v319
        %441 = vmatprep.subr.mxu0 0.0
        %442 = vmatpush1.xpose.msra.mxu0 %v316
        %443 = vmatprep.subr.mxu0 0.0
        %444 = vmatpush2.xpose.msra.mxu0 %v409
        %445 = vmatprep.subr.mxu0 0.0
        %446 = vmatpush2.xpose.msra.mxu0 %v406
        %447 = vmatprep.subr.mxu0 0.0
        %448 = vmatpush2.xpose.msra.mxu0 %v403
        %449 = vmatprep.subr.mxu0 0.0
        %450 = vmatpush2.xpose.msra.mxu0 %v400
        %451 = vmatprep.subr.mxu0 0.0
        %452 = vmatpush2.xpose.msra.mxu0 %v397
        %453 = vmatprep.subr.mxu0 0.0
        %454 = vmatpush2.xpose.msra.mxu0 %v394
        %455 = vmatprep.subr.mxu0 0.0
        %456 = vmatpush2.xpose.msra.mxu0 %v391
        %457 = vmatprep.subr.mxu0 0.0
        %458 = vmatpush2.xpose.msra.mxu0 %v388
        %459 = vmatprep.subr.mxu0 0.0
        %460 = vmatpush2.xpose.msra.mxu0 %v385
        %461 = vmatprep.subr.mxu0 0.0
        %462 = vmatpush2.xpose.msra.mxu0 %v382
        %463 = vmatprep.subr.mxu0 0.0
        %464 = vmatpush2.xpose.msra.mxu0 %v379
        %465 = vmatprep.subr.mxu0 0.0
        %466 = vmatpush2.xpose.msra.mxu0 %v376
        %467 = vmatprep.subr.mxu0 0.0
        %468 = vmatpush2.xpose.msra.mxu0 %v373
        %469 = vmatprep.subr.mxu0 0.0
        %470 = vmatpush2.xpose.msra.mxu0 %v370
        %471 = vmatprep.subr.mxu0 0.0
        %472 = vmatpush2.xpose.msra.mxu0 %v367
        %473 = vmatprep.subr.mxu0 0.0
        %474 = vmatpush2.xpose.msra.mxu0 %v364
        %475 = vmatprep.mubr.f32.mxu0 0.0
        %476 = vmatmul.mubr.f32.gmra.mxu0 %v313
        %v477 = vpop.f32.mrf.mxu0
        %v478 = vadd.f32 0.0, %v477
        %v479 = vpop.f32.mrf.mxu0
        %v480 = vadd.f32 0.0, %v479
        %481 = vdwg.mxu0
        %v483 = vsel %vm311, %v276, 0
        %v486 = vsel %vm311, %v244, 0
        %v489 = vsel %vm311, %v245, 0
        %v492 = vsel %vm311, %v246, 0
        %v495 = vsel %vm311, %v247, 0
        %v498 = vsel %vm311, %v248, 0
        %v501 = vsel %vm311, %v249, 0
        %v504 = vsel %vm311, %v250, 0
        %v507 = vsel %vm311, %v251, 0
        %v510 = vsel %vm311, %v252, 0
        %v513 = vsel %vm311, %v253, 0
        %v516 = vsel %vm311, %v254, 0
        %v519 = vsel %vm311, %v255, 0
        %v522 = vsel %vm311, %v256, 0
        %v525 = vsel %vm311, %v257, 0
        %v528 = vsel %vm311, %v258, 0
        %v531 = vsel %vm311, %v259, 0
        %v534 = vsel %vm311, %v260, 0
        %v537 = vsel %vm311, %v261, 0
        %v540 = vsel %vm311, %v262, 0
        %v543 = vsel %vm311, %v263, 0
        %v546 = vsel %vm311, %v264, 0
        %v549 = vsel %vm311, %v265, 0
        %v552 = vsel %vm311, %v266, 0
        %v555 = vsel %vm311, %v267, 0
        %v558 = vsel %vm311, %v268, 0
        %v561 = vsel %vm311, %v269, 0
        %v564 = vsel %vm311, %v270, 0
        %v567 = vsel %vm311, %v271, 0
        %v570 = vsel %vm311, %v272, 0
        %v573 = vsel %vm311, %v273, 0
        %v576 = vsel %vm311, %v274, 0
        %v579 = vsel %vm311, %v275, 0
        %581 = vmatprep.subr.mxu0 0.0
        %582 = vmatpush1.xpose.msra.mxu0 %v531
        %583 = vmatprep.subr.mxu0 0.0
        %584 = vmatpush1.xpose.msra.mxu0 %v528
        %585 = vmatprep.subr.mxu0 0.0
        %586 = vmatpush1.xpose.msra.mxu0 %v525
        %587 = vmatprep.subr.mxu0 0.0
        %588 = vmatpush1.xpose.msra.mxu0 %v522
        %589 = vmatprep.subr.mxu0 0.0
        %590 = vmatpush1.xpose.msra.mxu0 %v519
        %591 = vmatprep.subr.mxu0 0.0
        %592 = vmatpush1.xpose.msra.mxu0 %v516
        %593 = vmatprep.subr.mxu0 0.0
        %594 = vmatpush1.xpose.msra.mxu0 %v513
        %595 = vmatprep.subr.mxu0 0.0
        %596 = vmatpush1.xpose.msra.mxu0 %v510
        %597 = vmatprep.subr.mxu0 0.0
        %598 = vmatpush1.xpose.msra.mxu0 %v507
        %599 = vmatprep.subr.mxu0 0.0
        %600 = vmatpush1.xpose.msra.mxu0 %v504
        %601 = vmatprep.subr.mxu0 0.0
        %602 = vmatpush1.xpose.msra.mxu0 %v501
        %603 = vmatprep.subr.mxu0 0.0
        %604 = vmatpush1.xpose.msra.mxu0 %v498
        %605 = vmatprep.subr.mxu0 0.0
        %606 = vmatpush1.xpose.msra.mxu0 %v495
        %607 = vmatprep.subr.mxu0 0.0
        %608 = vmatpush1.xpose.msra.mxu0 %v492
        %609 = vmatprep.subr.mxu0 0.0
        %610 = vmatpush1.xpose.msra.mxu0 %v489
        %611 = vmatprep.subr.mxu0 0.0
        %612 = vmatpush1.xpose.msra.mxu0 %v486
        %613 = vmatprep.subr.mxu0 0.0
        %614 = vmatpush2.xpose.msra.mxu0 %v579
        %615 = vmatprep.subr.mxu0 0.0
        %616 = vmatpush2.xpose.msra.mxu0 %v576
        %617 = vmatprep.subr.mxu0 0.0
        %618 = vmatpush2.xpose.msra.mxu0 %v573
        %619 = vmatprep.subr.mxu0 0.0
        %620 = vmatpush2.xpose.msra.mxu0 %v570
        %621 = vmatprep.subr.mxu0 0.0
        %622 = vmatpush2.xpose.msra.mxu0 %v567
        %623 = vmatprep.subr.mxu0 0.0
        %624 = vmatpush2.xpose.msra.mxu0 %v564
        %625 = vmatprep.subr.mxu0 0.0
        %626 = vmatpush2.xpose.msra.mxu0 %v561
        %627 = vmatprep.subr.mxu0 0.0
        %628 = vmatpush2.xpose.msra.mxu0 %v558
        %629 = vmatprep.subr.mxu0 0.0
        %630 = vmatpush2.xpose.msra.mxu0 %v555
        %631 = vmatprep.subr.mxu0 0.0
        %632 = vmatpush2.xpose.msra.mxu0 %v552
        %633 = vmatprep.subr.mxu0 0.0
        %634 = vmatpush2.xpose.msra.mxu0 %v549
        %635 = vmatprep.subr.mxu0 0.0
        %636 = vmatpush2.xpose.msra.mxu0 %v546
        %637 = vmatprep.subr.mxu0 0.0
        %638 = vmatpush2.xpose.msra.mxu0 %v543
        %639 = vmatprep.subr.mxu0 0.0
        %640 = vmatpush2.xpose.msra.mxu0 %v540
        %641 = vmatprep.subr.mxu0 0.0
        %642 = vmatpush2.xpose.msra.mxu0 %v537
        %643 = vmatprep.subr.mxu0 0.0
        %644 = vmatpush2.xpose.msra.mxu0 %v534
        %645 = vmatprep.mubr.f32.mxu0 0.0
        %646 = vmatmul.mubr.f32.gmra.mxu0 %v483
        %v647 = vpop.f32.mrf.mxu0
        %v648 = vadd.f32 %v478, %v647
        %v649 = vpop.f32.mrf.mxu0
        %v650 = vadd.f32 %v480, %v649
        %651 = vdwg.mxu0
        %v652 = vld [vmem:[%s243 + $0x2] sm:$0xff]
        %v653 = vld [vmem:[%s243 + $0xa] sm:$0xff]
        %v654 = vld [vmem:[%s243 + $0x1a] sm:$0xff]
        %v655 = vld [vmem:[%s243 + $0x22] sm:$0xff]
        %v656 = vld [vmem:[%s243 + $0x32] sm:$0xff]
        %v657 = vld [vmem:[%s243 + $0x3a] sm:$0xff]
        %v658 = vld [vmem:[%s243 + $0x4a] sm:$0xff]
        %v659 = vld [vmem:[%s243 + $0x52] sm:$0xff]
        %v660 = vld [vmem:[%s243 + $0x62] sm:$0xff]
        %v661 = vld [vmem:[%s243 + $0x6a] sm:$0xff]
        %v662 = vld [vmem:[%s243 + $0x7a] sm:$0xff]
        %v663 = vld [vmem:[%s243 + $0x82] sm:$0xff]
        %v664 = vld [vmem:[%s243 + $0x92] sm:$0xff]
        %v665 = vld [vmem:[%s243 + $0x9a] sm:$0xff]
        %v666 = vld [vmem:[%s243 + $0xaa] sm:$0xff]
        %v667 = vld [vmem:[%s243 + $0xb2] sm:$0xff]
        %v668 = vld [vmem:[%s243 + $0xc2] sm:$0xff]
        %v669 = vld [vmem:[%s243 + $0xca] sm:$0xff]
        %v670 = vld [vmem:[%s243 + $0xda] sm:$0xff]
        %v671 = vld [vmem:[%s243 + $0xe2] sm:$0xff]
        %v672 = vld [vmem:[%s243 + $0xf2] sm:$0xff]
        %v673 = vld [vmem:[%s243 + $0xfa] sm:$0xff]
        %v674 = vld [vmem:[%s243 + $0x10a] sm:$0xff]
        %v675 = vld [vmem:[%s243 + $0x112] sm:$0xff]
        %v676 = vld [vmem:[%s243 + $0x122] sm:$0xff]
        %v677 = vld [vmem:[%s243 + $0x12a] sm:$0xff]
        %v678 = vld [vmem:[%s243 + $0x13a] sm:$0xff]
        %v679 = vld [vmem:[%s243 + $0x142] sm:$0xff]
        %v680 = vld [vmem:[%s243 + $0x152] sm:$0xff]
        %v681 = vld [vmem:[%s243 + $0x15a] sm:$0xff]
        %v682 = vld [vmem:[%s243 + $0x16a] sm:$0xff]
        %v683 = vld [vmem:[%s243 + $0x172] sm:$0xff]
        %s684 = scalar_lea.vmem %s1, 16
        %v685 = vld [vmem:[%s684] sm:$0xff]
        %v687 = vsel %vm311, %v685, 0
        %v690 = vsel %vm311, %v652, 0
        %v693 = vsel %vm311, %v653, 0
        %v696 = vsel %vm311, %v654, 0
        %v699 = vsel %vm311, %v655, 0
        %v702 = vsel %vm311, %v656, 0
        %v705 = vsel %vm311, %v657, 0
        %v708 = vsel %vm311, %v658, 0
        %v711 = vsel %vm311, %v659, 0
        %v714 = vsel %vm311, %v660, 0
        %v717 = vsel %vm311, %v661, 0
        %v720 = vsel %vm311, %v662, 0
        %v723 = vsel %vm311, %v663, 0
        %v726 = vsel %vm311, %v664, 0
        %v729 = vsel %vm311, %v665, 0
        %v732 = vsel %vm311, %v666, 0
        %v735 = vsel %vm311, %v667, 0
        %v738 = vsel %vm311, %v668, 0
        %v741 = vsel %vm311, %v669, 0
        %v744 = vsel %vm311, %v670, 0
        %v747 = vsel %vm311, %v671, 0
        %v750 = vsel %vm311, %v672, 0
        %v753 = vsel %vm311, %v673, 0
        %v756 = vsel %vm311, %v674, 0
        %v759 = vsel %vm311, %v675, 0
        %v762 = vsel %vm311, %v676, 0
        %v765 = vsel %vm311, %v677, 0
        %v768 = vsel %vm311, %v678, 0
        %v771 = vsel %vm311, %v679, 0
        %v774 = vsel %vm311, %v680, 0
        %v777 = vsel %vm311, %v681, 0
        %v780 = vsel %vm311, %v682, 0
        %v783 = vsel %vm311, %v683, 0
        %785 = vmatprep.subr.mxu0 0.0
        %786 = vmatpush1.xpose.msra.mxu0 %v735
        %787 = vmatprep.subr.mxu0 0.0
        %788 = vmatpush1.xpose.msra.mxu0 %v732
        %789 = vmatprep.subr.mxu0 0.0
        %790 = vmatpush1.xpose.msra.mxu0 %v729
        %791 = vmatprep.subr.mxu0 0.0
        %792 = vmatpush1.xpose.msra.mxu0 %v726
        %793 = vmatprep.subr.mxu0 0.0
        %794 = vmatpush1.xpose.msra.mxu0 %v723
        %795 = vmatprep.subr.mxu0 0.0
        %796 = vmatpush1.xpose.msra.mxu0 %v720
        %797 = vmatprep.subr.mxu0 0.0
        %798 = vmatpush1.xpose.msra.mxu0 %v717
        %799 = vmatprep.subr.mxu0 0.0
        %800 = vmatpush1.xpose.msra.mxu0 %v714
        %801 = vmatprep.subr.mxu0 0.0
        %802 = vmatpush1.xpose.msra.mxu0 %v711
        %803 = vmatprep.subr.mxu0 0.0
        %804 = vmatpush1.xpose.msra.mxu0 %v708
        %805 = vmatprep.subr.mxu0 0.0
        %806 = vmatpush1.xpose.msra.mxu0 %v705
        %807 = vmatprep.subr.mxu0 0.0
        %808 = vmatpush1.xpose.msra.mxu0 %v702
        %809 = vmatprep.subr.mxu0 0.0
        %810 = vmatpush1.xpose.msra.mxu0 %v699
        %811 = vmatprep.subr.mxu0 0.0
        %812 = vmatpush1.xpose.msra.mxu0 %v696
        %813 = vmatprep.subr.mxu0 0.0
        %814 = vmatpush1.xpose.msra.mxu0 %v693
        %815 = vmatprep.subr.mxu0 0.0
        %816 = vmatpush1.xpose.msra.mxu0 %v690
        %817 = vmatprep.subr.mxu0 0.0
        %818 = vmatpush2.xpose.msra.mxu0 %v783
        %819 = vmatprep.subr.mxu0 0.0
        %820 = vmatpush2.xpose.msra.mxu0 %v780
        %821 = vmatprep.subr.mxu0 0.0
        %822 = vmatpush2.xpose.msra.mxu0 %v777
        %823 = vmatprep.subr.mxu0 0.0
        %824 = vmatpush2.xpose.msra.mxu0 %v774
        %825 = vmatprep.subr.mxu0 0.0
        %826 = vmatpush2.xpose.msra.mxu0 %v771
        %827 = vmatprep.subr.mxu0 0.0
        %828 = vmatpush2.xpose.msra.mxu0 %v768
        %829 = vmatprep.subr.mxu0 0.0
        %830 = vmatpush2.xpose.msra.mxu0 %v765
        %831 = vmatprep.subr.mxu0 0.0
        %832 = vmatpush2.xpose.msra.mxu0 %v762
        %833 = vmatprep.subr.mxu0 0.0
        %834 = vmatpush2.xpose.msra.mxu0 %v759
        %835 = vmatprep.subr.mxu0 0.0
        %836 = vmatpush2.xpose.msra.mxu0 %v756
        %837 = vmatprep.subr.mxu0 0.0
        %838 = vmatpush2.xpose.msra.mxu0 %v753
        %839 = vmatprep.subr.mxu0 0.0
        %840 = vmatpush2.xpose.msra.mxu0 %v750
        %841 = vmatprep.subr.mxu0 0.0
        %842 = vmatpush2.xpose.msra.mxu0 %v747
        %843 = vmatprep.subr.mxu0 0.0
        %844 = vmatpush2.xpose.msra.mxu0 %v744
        %845 = vmatprep.subr.mxu0 0.0
        %846 = vmatpush2.xpose.msra.mxu0 %v741
        %847 = vmatprep.subr.mxu0 0.0
        %848 = vmatpush2.xpose.msra.mxu0 %v738
        %849 = vmatprep.mubr.f32.mxu0 0.0
        %850 = vmatmul.mubr.f32.gmra.mxu0 %v687
        %v851 = vpop.f32.mrf.mxu0
        %v852 = vadd.f32 0.0, %v851
        %v853 = vpop.f32.mrf.mxu0
        %v854 = vadd.f32 0.0, %v853
        %855 = vdwg.mxu0
        %v856 = vadd.f32 %v648, %v852
        %v857 = vadd.f32 %v650, %v854
        %s858 = sadd.s32 %s241, 1
        %s859 = smul.u32 %s858, 24
        %s860 = scalar_lea.vmem %s230, %s859
        %v861 = vld [vmem:[%s860] sm:$0xff]
        %v862 = vld [vmem:[%s860 + $0x8] sm:$0xff]
        %v863 = vld [vmem:[%s860 + $0x18] sm:$0xff]
        %v864 = vld [vmem:[%s860 + $0x20] sm:$0xff]
        %v865 = vld [vmem:[%s860 + $0x30] sm:$0xff]
        %v866 = vld [vmem:[%s860 + $0x38] sm:$0xff]
        %v867 = vld [vmem:[%s860 + $0x48] sm:$0xff]
        %v868 = vld [vmem:[%s860 + $0x50] sm:$0xff]
        %v869 = vld [vmem:[%s860 + $0x60] sm:$0xff]
        %v870 = vld [vmem:[%s860 + $0x68] sm:$0xff]
        %v871 = vld [vmem:[%s860 + $0x78] sm:$0xff]
        %v872 = vld [vmem:[%s860 + $0x80] sm:$0xff]
        %v873 = vld [vmem:[%s860 + $0x90] sm:$0xff]
        %v874 = vld [vmem:[%s860 + $0x98] sm:$0xff]
        %v875 = vld [vmem:[%s860 + $0xa8] sm:$0xff]
        %v876 = vld [vmem:[%s860 + $0xb0] sm:$0xff]
        %v877 = vld [vmem:[%s860 + $0xc0] sm:$0xff]
        %v878 = vld [vmem:[%s860 + $0xc8] sm:$0xff]
        %v879 = vld [vmem:[%s860 + $0xd8] sm:$0xff]
        %v880 = vld [vmem:[%s860 + $0xe0] sm:$0xff]
        %v881 = vld [vmem:[%s860 + $0xf0] sm:$0xff]
        %v882 = vld [vmem:[%s860 + $0xf8] sm:$0xff]
        %v883 = vld [vmem:[%s860 + $0x108] sm:$0xff]
        %v884 = vld [vmem:[%s860 + $0x110] sm:$0xff]
        %v885 = vld [vmem:[%s860 + $0x120] sm:$0xff]
        %v886 = vld [vmem:[%s860 + $0x128] sm:$0xff]
        %v887 = vld [vmem:[%s860 + $0x138] sm:$0xff]
        %v888 = vld [vmem:[%s860 + $0x140] sm:$0xff]
        %v889 = vld [vmem:[%s860 + $0x150] sm:$0xff]
        %v890 = vld [vmem:[%s860 + $0x158] sm:$0xff]
        %v891 = vld [vmem:[%s860 + $0x168] sm:$0xff]
        %v892 = vld [vmem:[%s860 + $0x170] sm:$0xff]
        %s893 = scalar_lea.vmem %s1, 24
        %v894 = vld [vmem:[%s893] sm:$0xff]
        %v896 = vsel %vm311, %v894, 0
        %v899 = vsel %vm311, %v861, 0
        %v902 = vsel %vm311, %v862, 0
        %v905 = vsel %vm311, %v863, 0
        %v908 = vsel %vm311, %v864, 0
        %v911 = vsel %vm311, %v865, 0
        %v914 = vsel %vm311, %v866, 0
        %v917 = vsel %vm311, %v867, 0
        %v920 = vsel %vm311, %v868, 0
        %v923 = vsel %vm311, %v869, 0
        %v926 = vsel %vm311, %v870, 0
        %v929 = vsel %vm311, %v871, 0
        %v932 = vsel %vm311, %v872, 0
        %v935 = vsel %vm311, %v873, 0
        %v938 = vsel %vm311, %v874, 0
        %v941 = vsel %vm311, %v875, 0
        %v944 = vsel %vm311, %v876, 0
        %v947 = vsel %vm311, %v877, 0
        %v950 = vsel %vm311, %v878, 0
        %v953 = vsel %vm311, %v879, 0
        %v956 = vsel %vm311, %v880, 0
        %v959 = vsel %vm311, %v881, 0
        %v962 = vsel %vm311, %v882, 0
        %v965 = vsel %vm311, %v883, 0
        %v968 = vsel %vm311, %v884, 0
        %v971 = vsel %vm311, %v885, 0
        %v974 = vsel %vm311, %v886, 0
        %v977 = vsel %vm311, %v887, 0
        %v980 = vsel %vm311, %v888, 0
        %v983 = vsel %vm311, %v889, 0
        %v986 = vsel %vm311, %v890, 0
        %v989 = vsel %vm311, %v891, 0
        %v992 = vsel %vm311, %v892, 0
        %994 = vmatprep.subr.mxu0 0.0
        %995 = vmatpush1.xpose.msra.mxu0 %v944
        %996 = vmatprep.subr.mxu0 0.0
        %997 = vmatpush1.xpose.msra.mxu0 %v941
        %998 = vmatprep.subr.mxu0 0.0
        %999 = vmatpush1.xpose.msra.mxu0 %v938
        %1000 = vmatprep.subr.mxu0 0.0
        %1001 = vmatpush1.xpose.msra.mxu0 %v935
        %1002 = vmatprep.subr.mxu0 0.0
        %1003 = vmatpush1.xpose.msra.mxu0 %v932
        %1004 = vmatprep.subr.mxu0 0.0
        %1005 = vmatpush1.xpose.msra.mxu0 %v929
        %1006 = vmatprep.subr.mxu0 0.0
        %1007 = vmatpush1.xpose.msra.mxu0 %v926
        %1008 = vmatprep.subr.mxu0 0.0
        %1009 = vmatpush1.xpose.msra.mxu0 %v923
        %1010 = vmatprep.subr.mxu0 0.0
        %1011 = vmatpush1.xpose.msra.mxu0 %v920
        %1012 = vmatprep.subr.mxu0 0.0
        %1013 = vmatpush1.xpose.msra.mxu0 %v917
        %1014 = vmatprep.subr.mxu0 0.0
        %1015 = vmatpush1.xpose.msra.mxu0 %v914
        %1016 = vmatprep.subr.mxu0 0.0
        %1017 = vmatpush1.xpose.msra.mxu0 %v911
        %1018 = vmatprep.subr.mxu0 0.0
        %1019 = vmatpush1.xpose.msra.mxu0 %v908
        %1020 = vmatprep.subr.mxu0 0.0
        %1021 = vmatpush1.xpose.msra.mxu0 %v905
        %1022 = vmatprep.subr.mxu0 0.0
        %1023 = vmatpush1.xpose.msra.mxu0 %v902
        %1024 = vmatprep.subr.mxu0 0.0
        %1025 = vmatpush1.xpose.msra.mxu0 %v899
        %1026 = vmatprep.subr.mxu0 0.0
        %1027 = vmatpush2.xpose.msra.mxu0 %v992
        %1028 = vmatprep.subr.mxu0 0.0
        %1029 = vmatpush2.xpose.msra.mxu0 %v989
        %1030 = vmatprep.subr.mxu0 0.0
        %1031 = vmatpush2.xpose.msra.mxu0 %v986
        %1032 = vmatprep.subr.mxu0 0.0
        %1033 = vmatpush2.xpose.msra.mxu0 %v983
        %1034 = vmatprep.subr.mxu0 0.0
        %1035 = vmatpush2.xpose.msra.mxu0 %v980
        %1036 = vmatprep.subr.mxu0 0.0
        %1037 = vmatpush2.xpose.msra.mxu0 %v977
        %1038 = vmatprep.subr.mxu0 0.0
        %1039 = vmatpush2.xpose.msra.mxu0 %v974
        %1040 = vmatprep.subr.mxu0 0.0
        %1041 = vmatpush2.xpose.msra.mxu0 %v971
        %1042 = vmatprep.subr.mxu0 0.0
        %1043 = vmatpush2.xpose.msra.mxu0 %v968
        %1044 = vmatprep.subr.mxu0 0.0
        %1045 = vmatpush2.xpose.msra.mxu0 %v965
        %1046 = vmatprep.subr.mxu0 0.0
        %1047 = vmatpush2.xpose.msra.mxu0 %v962
        %1048 = vmatprep.subr.mxu0 0.0
        %1049 = vmatpush2.xpose.msra.mxu0 %v959
        %1050 = vmatprep.subr.mxu0 0.0
        %1051 = vmatpush2.xpose.msra.mxu0 %v956
        %1052 = vmatprep.subr.mxu0 0.0
        %1053 = vmatpush2.xpose.msra.mxu0 %v953
        %1054 = vmatprep.subr.mxu0 0.0
        %1055 = vmatpush2.xpose.msra.mxu0 %v950
        %1056 = vmatprep.subr.mxu0 0.0
        %1057 = vmatpush2.xpose.msra.mxu0 %v947
        %1058 = vmatprep.mubr.f32.mxu0 0.0
        %1059 = vmatmul.mubr.f32.gmra.mxu0 %v896
        %v1060 = vpop.f32.mrf.mxu0
        %v1061 = vadd.f32 0.0, %v1060
        %v1062 = vpop.f32.mrf.mxu0
        %v1063 = vadd.f32 0.0, %v1062
        %1064 = vdwg.mxu0
        %v1065 = vadd.f32 %v856, %v1061
        %v1066 = vadd.f32 %v857, %v1063
        %v1067 = vld [vmem:[%s860 + $0x1] sm:$0xff]
        %v1068 = vld [vmem:[%s860 + $0x9] sm:$0xff]
        %v1069 = vld [vmem:[%s860 + $0x19] sm:$0xff]
        %v1070 = vld [vmem:[%s860 + $0x21] sm:$0xff]
        %v1071 = vld [vmem:[%s860 + $0x31] sm:$0xff]
        %v1072 = vld [vmem:[%s860 + $0x39] sm:$0xff]
        %v1073 = vld [vmem:[%s860 + $0x49] sm:$0xff]
        %v1074 = vld [vmem:[%s860 + $0x51] sm:$0xff]
        %v1075 = vld [vmem:[%s860 + $0x61] sm:$0xff]
        %v1076 = vld [vmem:[%s860 + $0x69] sm:$0xff]
        %v1077 = vld [vmem:[%s860 + $0x79] sm:$0xff]
        %v1078 = vld [vmem:[%s860 + $0x81] sm:$0xff]
        %v1079 = vld [vmem:[%s860 + $0x91] sm:$0xff]
        %v1080 = vld [vmem:[%s860 + $0x99] sm:$0xff]
        %v1081 = vld [vmem:[%s860 + $0xa9] sm:$0xff]
        %v1082 = vld [vmem:[%s860 + $0xb1] sm:$0xff]
        %v1083 = vld [vmem:[%s860 + $0xc1] sm:$0xff]
        %v1084 = vld [vmem:[%s860 + $0xc9] sm:$0xff]
        %v1085 = vld [vmem:[%s860 + $0xd9] sm:$0xff]
        %v1086 = vld [vmem:[%s860 + $0xe1] sm:$0xff]
        %v1087 = vld [vmem:[%s860 + $0xf1] sm:$0xff]
        %v1088 = vld [vmem:[%s860 + $0xf9] sm:$0xff]
        %v1089 = vld [vmem:[%s860 + $0x109] sm:$0xff]
        %v1090 = vld [vmem:[%s860 + $0x111] sm:$0xff]
        %v1091 = vld [vmem:[%s860 + $0x121] sm:$0xff]
        %v1092 = vld [vmem:[%s860 + $0x129] sm:$0xff]
        %v1093 = vld [vmem:[%s860 + $0x139] sm:$0xff]
        %v1094 = vld [vmem:[%s860 + $0x141] sm:$0xff]
        %v1095 = vld [vmem:[%s860 + $0x151] sm:$0xff]
        %v1096 = vld [vmem:[%s860 + $0x159] sm:$0xff]
        %v1097 = vld [vmem:[%s860 + $0x169] sm:$0xff]
        %v1098 = vld [vmem:[%s860 + $0x171] sm:$0xff]
        %s1099 = scalar_lea.vmem %s1, 32
        %v1100 = vld [vmem:[%s1099] sm:$0xff]
        %v1102 = vsel %vm311, %v1100, 0
        %v1105 = vsel %vm311, %v1067, 0
        %v1108 = vsel %vm311, %v1068, 0
        %v1111 = vsel %vm311, %v1069, 0
        %v1114 = vsel %vm311, %v1070, 0
        %v1117 = vsel %vm311, %v1071, 0
        %v1120 = vsel %vm311, %v1072, 0
        %v1123 = vsel %vm311, %v1073, 0
        %v1126 = vsel %vm311, %v1074, 0
        %v1129 = vsel %vm311, %v1075, 0
        %v1132 = vsel %vm311, %v1076, 0
        %v1135 = vsel %vm311, %v1077, 0
        %v1138 = vsel %vm311, %v1078, 0
        %v1141 = vsel %vm311, %v1079, 0
        %v1144 = vsel %vm311, %v1080, 0
        %v1147 = vsel %vm311, %v1081, 0
        %v1150 = vsel %vm311, %v1082, 0
        %v1153 = vsel %vm311, %v1083, 0
        %v1156 = vsel %vm311, %v1084, 0
        %v1159 = vsel %vm311, %v1085, 0
        %v1162 = vsel %vm311, %v1086, 0
        %v1165 = vsel %vm311, %v1087, 0
        %v1168 = vsel %vm311, %v1088, 0
        %v1171 = vsel %vm311, %v1089, 0
        %v1174 = vsel %vm311, %v1090, 0
        %v1177 = vsel %vm311, %v1091, 0
        %v1180 = vsel %vm311, %v1092, 0
        %v1183 = vsel %vm311, %v1093, 0
        %v1186 = vsel %vm311, %v1094, 0
        %v1189 = vsel %vm311, %v1095, 0
        %v1192 = vsel %vm311, %v1096, 0
        %v1195 = vsel %vm311, %v1097, 0
        %v1198 = vsel %vm311, %v1098, 0
        %1200 = vmatprep.subr.mxu0 0.0
        %1201 = vmatpush1.xpose.msra.mxu0 %v1150
        %1202 = vmatprep.subr.mxu0 0.0
        %1203 = vmatpush1.xpose.msra.mxu0 %v1147
        %1204 = vmatprep.subr.mxu0 0.0
        %1205 = vmatpush1.xpose.msra.mxu0 %v1144
        %1206 = vmatprep.subr.mxu0 0.0
        %1207 = vmatpush1.xpose.msra.mxu0 %v1141
        %1208 = vmatprep.subr.mxu0 0.0
        %1209 = vmatpush1.xpose.msra.mxu0 %v1138
        %1210 = vmatprep.subr.mxu0 0.0
        %1211 = vmatpush1.xpose.msra.mxu0 %v1135
        %1212 = vmatprep.subr.mxu0 0.0
        %1213 = vmatpush1.xpose.msra.mxu0 %v1132
        %1214 = vmatprep.subr.mxu0 0.0
        %1215 = vmatpush1.xpose.msra.mxu0 %v1129
        %1216 = vmatprep.subr.mxu0 0.0
        %1217 = vmatpush1.xpose.msra.mxu0 %v1126
        %1218 = vmatprep.subr.mxu0 0.0
        %1219 = vmatpush1.xpose.msra.mxu0 %v1123
        %1220 = vmatprep.subr.mxu0 0.0
        %1221 = vmatpush1.xpose.msra.mxu0 %v1120
        %1222 = vmatprep.subr.mxu0 0.0
        %1223 = vmatpush1.xpose.msra.mxu0 %v1117
        %1224 = vmatprep.subr.mxu0 0.0
        %1225 = vmatpush1.xpose.msra.mxu0 %v1114
        %1226 = vmatprep.subr.mxu0 0.0
        %1227 = vmatpush1.xpose.msra.mxu0 %v1111
        %1228 = vmatprep.subr.mxu0 0.0
        %1229 = vmatpush1.xpose.msra.mxu0 %v1108
        %1230 = vmatprep.subr.mxu0 0.0
        %1231 = vmatpush1.xpose.msra.mxu0 %v1105
        %1232 = vmatprep.subr.mxu0 0.0
        %1233 = vmatpush2.xpose.msra.mxu0 %v1198
        %1234 = vmatprep.subr.mxu0 0.0
        %1235 = vmatpush2.xpose.msra.mxu0 %v1195
        %1236 = vmatprep.subr.mxu0 0.0
        %1237 = vmatpush2.xpose.msra.mxu0 %v1192
        %1238 = vmatprep.subr.mxu0 0.0
        %1239 = vmatpush2.xpose.msra.mxu0 %v1189
        %1240 = vmatprep.subr.mxu0 0.0
        %1241 = vmatpush2.xpose.msra.mxu0 %v1186
        %1242 = vmatprep.subr.mxu0 0.0
        %1243 = vmatpush2.xpose.msra.mxu0 %v1183
        %1244 = vmatprep.subr.mxu0 0.0
        %1245 = vmatpush2.xpose.msra.mxu0 %v1180
        %1246 = vmatprep.subr.mxu0 0.0
        %1247 = vmatpush2.xpose.msra.mxu0 %v1177
        %1248 = vmatprep.subr.mxu0 0.0
        %1249 = vmatpush2.xpose.msra.mxu0 %v1174
        %1250 = vmatprep.subr.mxu0 0.0
        %1251 = vmatpush2.xpose.msra.mxu0 %v1171
        %1252 = vmatprep.subr.mxu0 0.0
        %1253 = vmatpush2.xpose.msra.mxu0 %v1168
        %1254 = vmatprep.subr.mxu0 0.0
        %1255 = vmatpush2.xpose.msra.mxu0 %v1165
        %1256 = vmatprep.subr.mxu0 0.0
        %1257 = vmatpush2.xpose.msra.mxu0 %v1162
        %1258 = vmatprep.subr.mxu0 0.0
        %1259 = vmatpush2.xpose.msra.mxu0 %v1159
        %1260 = vmatprep.subr.mxu0 0.0
        %1261 = vmatpush2.xpose.msra.mxu0 %v1156
        %1262 = vmatprep.subr.mxu0 0.0
        %1263 = vmatpush2.xpose.msra.mxu0 %v1153
        %1264 = vmatprep.mubr.f32.mxu0 0.0
        %1265 = vmatmul.mubr.f32.gmra.mxu0 %v1102
        %v1266 = vpop.f32.mrf.mxu0
        %v1267 = vadd.f32 0.0, %v1266
        %v1268 = vpop.f32.mrf.mxu0
        %v1269 = vadd.f32 0.0, %v1268
        %1270 = vdwg.mxu0
        %v1271 = vadd.f32 %v1065, %v1267
        %v1272 = vadd.f32 %v1066, %v1269
        %v1273 = vld [vmem:[%s860 + $0x2] sm:$0xff]
        %v1274 = vld [vmem:[%s860 + $0xa] sm:$0xff]
        %v1275 = vld [vmem:[%s860 + $0x1a] sm:$0xff]
        %v1276 = vld [vmem:[%s860 + $0x22] sm:$0xff]
        %v1277 = vld [vmem:[%s860 + $0x32] sm:$0xff]
        %v1278 = vld [vmem:[%s860 + $0x3a] sm:$0xff]
        %v1279 = vld [vmem:[%s860 + $0x4a] sm:$0xff]
        %v1280 = vld [vmem:[%s860 + $0x52] sm:$0xff]
        %v1281 = vld [vmem:[%s860 + $0x62] sm:$0xff]
        %v1282 = vld [vmem:[%s860 + $0x6a] sm:$0xff]
        %v1283 = vld [vmem:[%s860 + $0x7a] sm:$0xff]
        %v1284 = vld [vmem:[%s860 + $0x82] sm:$0xff]
        %v1285 = vld [vmem:[%s860 + $0x92] sm:$0xff]
        %v1286 = vld [vmem:[%s860 + $0x9a] sm:$0xff]
        %v1287 = vld [vmem:[%s860 + $0xaa] sm:$0xff]
        %v1288 = vld [vmem:[%s860 + $0xb2] sm:$0xff]
        %v1289 = vld [vmem:[%s860 + $0xc2] sm:$0xff]
        %v1290 = vld [vmem:[%s860 + $0xca] sm:$0xff]
        %v1291 = vld [vmem:[%s860 + $0xda] sm:$0xff]
        %v1292 = vld [vmem:[%s860 + $0xe2] sm:$0xff]
        %v1293 = vld [vmem:[%s860 + $0xf2] sm:$0xff]
        %v1294 = vld [vmem:[%s860 + $0xfa] sm:$0xff]
        %v1295 = vld [vmem:[%s860 + $0x10a] sm:$0xff]
        %v1296 = vld [vmem:[%s860 + $0x112] sm:$0xff]
        %v1297 = vld [vmem:[%s860 + $0x122] sm:$0xff]
        %v1298 = vld [vmem:[%s860 + $0x12a] sm:$0xff]
        %v1299 = vld [vmem:[%s860 + $0x13a] sm:$0xff]
        %v1300 = vld [vmem:[%s860 + $0x142] sm:$0xff]
        %v1301 = vld [vmem:[%s860 + $0x152] sm:$0xff]
        %v1302 = vld [vmem:[%s860 + $0x15a] sm:$0xff]
        %v1303 = vld [vmem:[%s860 + $0x16a] sm:$0xff]
        %v1304 = vld [vmem:[%s860 + $0x172] sm:$0xff]
        %s1305 = scalar_lea.vmem %s1, 40
        %v1306 = vld [vmem:[%s1305] sm:$0xff]
        %v1308 = vsel %vm311, %v1306, 0
        %v1311 = vsel %vm311, %v1273, 0
        %v1314 = vsel %vm311, %v1274, 0
        %v1317 = vsel %vm311, %v1275, 0
        %v1320 = vsel %vm311, %v1276, 0
        %v1323 = vsel %vm311, %v1277, 0
        %v1326 = vsel %vm311, %v1278, 0
        %v1329 = vsel %vm311, %v1279, 0
        %v1332 = vsel %vm311, %v1280, 0
        %v1335 = vsel %vm311, %v1281, 0
        %v1338 = vsel %vm311, %v1282, 0
        %v1341 = vsel %vm311, %v1283, 0
        %v1344 = vsel %vm311, %v1284, 0
        %v1347 = vsel %vm311, %v1285, 0
        %v1350 = vsel %vm311, %v1286, 0
        %v1353 = vsel %vm311, %v1287, 0
        %v1356 = vsel %vm311, %v1288, 0
        %v1359 = vsel %vm311, %v1289, 0
        %v1362 = vsel %vm311, %v1290, 0
        %v1365 = vsel %vm311, %v1291, 0
        %v1368 = vsel %vm311, %v1292, 0
        %v1371 = vsel %vm311, %v1293, 0
        %v1374 = vsel %vm311, %v1294, 0
        %v1377 = vsel %vm311, %v1295, 0
        %v1380 = vsel %vm311, %v1296, 0
        %v1383 = vsel %vm311, %v1297, 0
        %v1386 = vsel %vm311, %v1298, 0
        %v1389 = vsel %vm311, %v1299, 0
        %v1392 = vsel %vm311, %v1300, 0
        %v1395 = vsel %vm311, %v1301, 0
        %v1398 = vsel %vm311, %v1302, 0
        %v1401 = vsel %vm311, %v1303, 0
        %v1404 = vsel %vm311, %v1304, 0
        %1406 = vmatprep.subr.mxu0 0.0
        %1407 = vmatpush1.xpose.msra.mxu0 %v1356
        %1408 = vmatprep.subr.mxu0 0.0
        %1409 = vmatpush1.xpose.msra.mxu0 %v1353
        %1410 = vmatprep.subr.mxu0 0.0
        %1411 = vmatpush1.xpose.msra.mxu0 %v1350
        %1412 = vmatprep.subr.mxu0 0.0
        %1413 = vmatpush1.xpose.msra.mxu0 %v1347
        %1414 = vmatprep.subr.mxu0 0.0
        %1415 = vmatpush1.xpose.msra.mxu0 %v1344
        %1416 = vmatprep.subr.mxu0 0.0
        %1417 = vmatpush1.xpose.msra.mxu0 %v1341
        %1418 = vmatprep.subr.mxu0 0.0
        %1419 = vmatpush1.xpose.msra.mxu0 %v1338
        %1420 = vmatprep.subr.mxu0 0.0
        %1421 = vmatpush1.xpose.msra.mxu0 %v1335
        %1422 = vmatprep.subr.mxu0 0.0
        %1423 = vmatpush1.xpose.msra.mxu0 %v1332
        %1424 = vmatprep.subr.mxu0 0.0
        %1425 = vmatpush1.xpose.msra.mxu0 %v1329
        %1426 = vmatprep.subr.mxu0 0.0
        %1427 = vmatpush1.xpose.msra.mxu0 %v1326
        %1428 = vmatprep.subr.mxu0 0.0
        %1429 = vmatpush1.xpose.msra.mxu0 %v1323
        %1430 = vmatprep.subr.mxu0 0.0
        %1431 = vmatpush1.xpose.msra.mxu0 %v1320
        %1432 = vmatprep.subr.mxu0 0.0
        %1433 = vmatpush1.xpose.msra.mxu0 %v1317
        %1434 = vmatprep.subr.mxu0 0.0
        %1435 = vmatpush1.xpose.msra.mxu0 %v1314
        %1436 = vmatprep.subr.mxu0 0.0
        %1437 = vmatpush1.xpose.msra.mxu0 %v1311
        %1438 = vmatprep.subr.mxu0 0.0
        %1439 = vmatpush2.xpose.msra.mxu0 %v1404
        %1440 = vmatprep.subr.mxu0 0.0
        %1441 = vmatpush2.xpose.msra.mxu0 %v1401
        %1442 = vmatprep.subr.mxu0 0.0
        %1443 = vmatpush2.xpose.msra.mxu0 %v1398
        %1444 = vmatprep.subr.mxu0 0.0
        %1445 = vmatpush2.xpose.msra.mxu0 %v1395
        %1446 = vmatprep.subr.mxu0 0.0
        %1447 = vmatpush2.xpose.msra.mxu0 %v1392
        %1448 = vmatprep.subr.mxu0 0.0
        %1449 = vmatpush2.xpose.msra.mxu0 %v1389
        %1450 = vmatprep.subr.mxu0 0.0
        %1451 = vmatpush2.xpose.msra.mxu0 %v1386
        %1452 = vmatprep.subr.mxu0 0.0
        %1453 = vmatpush2.xpose.msra.mxu0 %v1383
        %1454 = vmatprep.subr.mxu0 0.0
        %1455 = vmatpush2.xpose.msra.mxu0 %v1380
        %1456 = vmatprep.subr.mxu0 0.0
        %1457 = vmatpush2.xpose.msra.mxu0 %v1377
        %1458 = vmatprep.subr.mxu0 0.0
        %1459 = vmatpush2.xpose.msra.mxu0 %v1374
        %1460 = vmatprep.subr.mxu0 0.0
        %1461 = vmatpush2.xpose.msra.mxu0 %v1371
        %1462 = vmatprep.subr.mxu0 0.0
        %1463 = vmatpush2.xpose.msra.mxu0 %v1368
        %1464 = vmatprep.subr.mxu0 0.0
        %1465 = vmatpush2.xpose.msra.mxu0 %v1365
        %1466 = vmatprep.subr.mxu0 0.0
        %1467 = vmatpush2.xpose.msra.mxu0 %v1362
        %1468 = vmatprep.subr.mxu0 0.0
        %1469 = vmatpush2.xpose.msra.mxu0 %v1359
        %1470 = vmatprep.mubr.f32.mxu0 0.0
        %1471 = vmatmul.mubr.f32.gmra.mxu0 %v1308
        %v1472 = vpop.f32.mrf.mxu0
        %v1473 = vadd.f32 0.0, %v1472
        %v1474 = vpop.f32.mrf.mxu0
        %v1475 = vadd.f32 0.0, %v1474
        %1476 = vdwg.mxu0
        %v1477 = vadd.f32 %v1271, %v1473
        %v1478 = vadd.f32 %v1272, %v1475
        %s1479 = sadd.s32 %s241, 2
        %s1480 = smul.u32 %s1479, 24
        %s1481 = scalar_lea.vmem %s230, %s1480
        %v1482 = vld [vmem:[%s1481] sm:$0xff]
        %v1483 = vld [vmem:[%s1481 + $0x8] sm:$0xff]
        %v1484 = vld [vmem:[%s1481 + $0x18] sm:$0xff]
        %v1485 = vld [vmem:[%s1481 + $0x20] sm:$0xff]
        %v1486 = vld [vmem:[%s1481 + $0x30] sm:$0xff]
        %v1487 = vld [vmem:[%s1481 + $0x38] sm:$0xff]
        %v1488 = vld [vmem:[%s1481 + $0x48] sm:$0xff]
        %v1489 = vld [vmem:[%s1481 + $0x50] sm:$0xff]
        %v1490 = vld [vmem:[%s1481 + $0x60] sm:$0xff]
        %v1491 = vld [vmem:[%s1481 + $0x68] sm:$0xff]
        %v1492 = vld [vmem:[%s1481 + $0x78] sm:$0xff]
        %v1493 = vld [vmem:[%s1481 + $0x80] sm:$0xff]
        %v1494 = vld [vmem:[%s1481 + $0x90] sm:$0xff]
        %v1495 = vld [vmem:[%s1481 + $0x98] sm:$0xff]
        %v1496 = vld [vmem:[%s1481 + $0xa8] sm:$0xff]
        %v1497 = vld [vmem:[%s1481 + $0xb0] sm:$0xff]
        %v1498 = vld [vmem:[%s1481 + $0xc0] sm:$0xff]
        %v1499 = vld [vmem:[%s1481 + $0xc8] sm:$0xff]
        %v1500 = vld [vmem:[%s1481 + $0xd8] sm:$0xff]
        %v1501 = vld [vmem:[%s1481 + $0xe0] sm:$0xff]
        %v1502 = vld [vmem:[%s1481 + $0xf0] sm:$0xff]
        %v1503 = vld [vmem:[%s1481 + $0xf8] sm:$0xff]
        %v1504 = vld [vmem:[%s1481 + $0x108] sm:$0xff]
        %v1505 = vld [vmem:[%s1481 + $0x110] sm:$0xff]
        %v1506 = vld [vmem:[%s1481 + $0x120] sm:$0xff]
        %v1507 = vld [vmem:[%s1481 + $0x128] sm:$0xff]
        %v1508 = vld [vmem:[%s1481 + $0x138] sm:$0xff]
        %v1509 = vld [vmem:[%s1481 + $0x140] sm:$0xff]
        %v1510 = vld [vmem:[%s1481 + $0x150] sm:$0xff]
        %v1511 = vld [vmem:[%s1481 + $0x158] sm:$0xff]
        %v1512 = vld [vmem:[%s1481 + $0x168] sm:$0xff]
        %v1513 = vld [vmem:[%s1481 + $0x170] sm:$0xff]
        %s1514 = scalar_lea.vmem %s1, 48
        %v1515 = vld [vmem:[%s1514] sm:$0xff]
        %v1517 = vsel %vm311, %v1515, 0
        %v1520 = vsel %vm311, %v1482, 0
        %v1523 = vsel %vm311, %v1483, 0
        %v1526 = vsel %vm311, %v1484, 0
        %v1529 = vsel %vm311, %v1485, 0
        %v1532 = vsel %vm311, %v1486, 0
        %v1535 = vsel %vm311, %v1487, 0
        %v1538 = vsel %vm311, %v1488, 0
        %v1541 = vsel %vm311, %v1489, 0
        %v1544 = vsel %vm311, %v1490, 0
        %v1547 = vsel %vm311, %v1491, 0
        %v1550 = vsel %vm311, %v1492, 0
        %v1553 = vsel %vm311, %v1493, 0
        %v1556 = vsel %vm311, %v1494, 0
        %v1559 = vsel %vm311, %v1495, 0
        %v1562 = vsel %vm311, %v1496, 0
        %v1565 = vsel %vm311, %v1497, 0
        %v1568 = vsel %vm311, %v1498, 0
        %v1571 = vsel %vm311, %v1499, 0
        %v1574 = vsel %vm311, %v1500, 0
        %v1577 = vsel %vm311, %v1501, 0
        %v1580 = vsel %vm311, %v1502, 0
        %v1583 = vsel %vm311, %v1503, 0
        %v1586 = vsel %vm311, %v1504, 0
        %v1589 = vsel %vm311, %v1505, 0
        %v1592 = vsel %vm311, %v1506, 0
        %v1595 = vsel %vm311, %v1507, 0
        %v1598 = vsel %vm311, %v1508, 0
        %v1601 = vsel %vm311, %v1509, 0
        %v1604 = vsel %vm311, %v1510, 0
        %v1607 = vsel %vm311, %v1511, 0
        %v1610 = vsel %vm311, %v1512, 0
        %v1613 = vsel %vm311, %v1513, 0
        %1615 = vmatprep.subr.mxu0 0.0
        %1616 = vmatpush1.xpose.msra.mxu0 %v1565
        %1617 = vmatprep.subr.mxu0 0.0
        %1618 = vmatpush1.xpose.msra.mxu0 %v1562
        %1619 = vmatprep.subr.mxu0 0.0
        %1620 = vmatpush1.xpose.msra.mxu0 %v1559
        %1621 = vmatprep.subr.mxu0 0.0
        %1622 = vmatpush1.xpose.msra.mxu0 %v1556
        %1623 = vmatprep.subr.mxu0 0.0
        %1624 = vmatpush1.xpose.msra.mxu0 %v1553
        %1625 = vmatprep.subr.mxu0 0.0
        %1626 = vmatpush1.xpose.msra.mxu0 %v1550
        %1627 = vmatprep.subr.mxu0 0.0
        %1628 = vmatpush1.xpose.msra.mxu0 %v1547
        %1629 = vmatprep.subr.mxu0 0.0
        %1630 = vmatpush1.xpose.msra.mxu0 %v1544
        %1631 = vmatprep.subr.mxu0 0.0
        %1632 = vmatpush1.xpose.msra.mxu0 %v1541
        %1633 = vmatprep.subr.mxu0 0.0
        %1634 = vmatpush1.xpose.msra.mxu0 %v1538
        %1635 = vmatprep.subr.mxu0 0.0
        %1636 = vmatpush1.xpose.msra.mxu0 %v1535
        %1637 = vmatprep.subr.mxu0 0.0
        %1638 = vmatpush1.xpose.msra.mxu0 %v1532
        %1639 = vmatprep.subr.mxu0 0.0
        %1640 = vmatpush1.xpose.msra.mxu0 %v1529
        %1641 = vmatprep.subr.mxu0 0.0
        %1642 = vmatpush1.xpose.msra.mxu0 %v1526
        %1643 = vmatprep.subr.mxu0 0.0
        %1644 = vmatpush1.xpose.msra.mxu0 %v1523
        %1645 = vmatprep.subr.mxu0 0.0
        %1646 = vmatpush1.xpose.msra.mxu0 %v1520
        %1647 = vmatprep.subr.mxu0 0.0
        %1648 = vmatpush2.xpose.msra.mxu0 %v1613
        %1649 = vmatprep.subr.mxu0 0.0
        %1650 = vmatpush2.xpose.msra.mxu0 %v1610
        %1651 = vmatprep.subr.mxu0 0.0
        %1652 = vmatpush2.xpose.msra.mxu0 %v1607
        %1653 = vmatprep.subr.mxu0 0.0
        %1654 = vmatpush2.xpose.msra.mxu0 %v1604
        %1655 = vmatprep.subr.mxu0 0.0
        %1656 = vmatpush2.xpose.msra.mxu0 %v1601
        %1657 = vmatprep.subr.mxu0 0.0
        %1658 = vmatpush2.xpose.msra.mxu0 %v1598
        %1659 = vmatprep.subr.mxu0 0.0
        %1660 = vmatpush2.xpose.msra.mxu0 %v1595
        %1661 = vmatprep.subr.mxu0 0.0
        %1662 = vmatpush2.xpose.msra.mxu0 %v1592
        %1663 = vmatprep.subr.mxu0 0.0
        %1664 = vmatpush2.xpose.msra.mxu0 %v1589
        %1665 = vmatprep.subr.mxu0 0.0
        %1666 = vmatpush2.xpose.msra.mxu0 %v1586
        %1667 = vmatprep.subr.mxu0 0.0
        %1668 = vmatpush2.xpose.msra.mxu0 %v1583
        %1669 = vmatprep.subr.mxu0 0.0
        %1670 = vmatpush2.xpose.msra.mxu0 %v1580
        %1671 = vmatprep.subr.mxu0 0.0
        %1672 = vmatpush2.xpose.msra.mxu0 %v1577
        %1673 = vmatprep.subr.mxu0 0.0
        %1674 = vmatpush2.xpose.msra.mxu0 %v1574
        %1675 = vmatprep.subr.mxu0 0.0
        %1676 = vmatpush2.xpose.msra.mxu0 %v1571
        %1677 = vmatprep.subr.mxu0 0.0
        %1678 = vmatpush2.xpose.msra.mxu0 %v1568
        %1679 = vmatprep.mubr.f32.mxu0 0.0
        %1680 = vmatmul.mubr.f32.gmra.mxu0 %v1517
        %v1681 = vpop.f32.mrf.mxu0
        %v1682 = vadd.f32 0.0, %v1681
        %v1683 = vpop.f32.mrf.mxu0
        %v1684 = vadd.f32 0.0, %v1683
        %1685 = vdwg.mxu0
        %v1686 = vadd.f32 %v1477, %v1682
        %v1687 = vadd.f32 %v1478, %v1684
        %v1688 = vld [vmem:[%s1481 + $0x1] sm:$0xff]
        %v1689 = vld [vmem:[%s1481 + $0x9] sm:$0xff]
        %v1690 = vld [vmem:[%s1481 + $0x19] sm:$0xff]
        %v1691 = vld [vmem:[%s1481 + $0x21] sm:$0xff]
        %v1692 = vld [vmem:[%s1481 + $0x31] sm:$0xff]
        %v1693 = vld [vmem:[%s1481 + $0x39] sm:$0xff]
        %v1694 = vld [vmem:[%s1481 + $0x49] sm:$0xff]
        %v1695 = vld [vmem:[%s1481 + $0x51] sm:$0xff]
        %v1696 = vld [vmem:[%s1481 + $0x61] sm:$0xff]
        %v1697 = vld [vmem:[%s1481 + $0x69] sm:$0xff]
        %v1698 = vld [vmem:[%s1481 + $0x79] sm:$0xff]
        %v1699 = vld [vmem:[%s1481 + $0x81] sm:$0xff]
        %v1700 = vld [vmem:[%s1481 + $0x91] sm:$0xff]
        %v1701 = vld [vmem:[%s1481 + $0x99] sm:$0xff]
        %v1702 = vld [vmem:[%s1481 + $0xa9] sm:$0xff]
        %v1703 = vld [vmem:[%s1481 + $0xb1] sm:$0xff]
        %v1704 = vld [vmem:[%s1481 + $0xc1] sm:$0xff]
        %v1705 = vld [vmem:[%s1481 + $0xc9] sm:$0xff]
        %v1706 = vld [vmem:[%s1481 + $0xd9] sm:$0xff]
        %v1707 = vld [vmem:[%s1481 + $0xe1] sm:$0xff]
        %v1708 = vld [vmem:[%s1481 + $0xf1] sm:$0xff]
        %v1709 = vld [vmem:[%s1481 + $0xf9] sm:$0xff]
        %v1710 = vld [vmem:[%s1481 + $0x109] sm:$0xff]
        %v1711 = vld [vmem:[%s1481 + $0x111] sm:$0xff]
        %v1712 = vld [vmem:[%s1481 + $0x121] sm:$0xff]
        %v1713 = vld [vmem:[%s1481 + $0x129] sm:$0xff]
        %v1714 = vld [vmem:[%s1481 + $0x139] sm:$0xff]
        %v1715 = vld [vmem:[%s1481 + $0x141] sm:$0xff]
        %v1716 = vld [vmem:[%s1481 + $0x151] sm:$0xff]
        %v1717 = vld [vmem:[%s1481 + $0x159] sm:$0xff]
        %v1718 = vld [vmem:[%s1481 + $0x169] sm:$0xff]
        %v1719 = vld [vmem:[%s1481 + $0x171] sm:$0xff]
        %s1720 = scalar_lea.vmem %s1, 56
        %v1721 = vld [vmem:[%s1720] sm:$0xff]
        %v1723 = vsel %vm311, %v1721, 0
        %v1726 = vsel %vm311, %v1688, 0
        %v1729 = vsel %vm311, %v1689, 0
        %v1732 = vsel %vm311, %v1690, 0
        %v1735 = vsel %vm311, %v1691, 0
        %v1738 = vsel %vm311, %v1692, 0
        %v1741 = vsel %vm311, %v1693, 0
        %v1744 = vsel %vm311, %v1694, 0
        %v1747 = vsel %vm311, %v1695, 0
        %v1750 = vsel %vm311, %v1696, 0
        %v1753 = vsel %vm311, %v1697, 0
        %v1756 = vsel %vm311, %v1698, 0
        %v1759 = vsel %vm311, %v1699, 0
        %v1762 = vsel %vm311, %v1700, 0
        %v1765 = vsel %vm311, %v1701, 0
        %v1768 = vsel %vm311, %v1702, 0
        %v1771 = vsel %vm311, %v1703, 0
        %v1774 = vsel %vm311, %v1704, 0
        %v1777 = vsel %vm311, %v1705, 0
        %v1780 = vsel %vm311, %v1706, 0
        %v1783 = vsel %vm311, %v1707, 0
        %v1786 = vsel %vm311, %v1708, 0
        %v1789 = vsel %vm311, %v1709, 0
        %v1792 = vsel %vm311, %v1710, 0
        %v1795 = vsel %vm311, %v1711, 0
        %v1798 = vsel %vm311, %v1712, 0
        %v1801 = vsel %vm311, %v1713, 0
        %v1804 = vsel %vm311, %v1714, 0
        %v1807 = vsel %vm311, %v1715, 0
        %v1810 = vsel %vm311, %v1716, 0
        %v1813 = vsel %vm311, %v1717, 0
        %v1816 = vsel %vm311, %v1718, 0
        %v1819 = vsel %vm311, %v1719, 0
        %1821 = vmatprep.subr.mxu0 0.0
        %1822 = vmatpush1.xpose.msra.mxu0 %v1771
        %1823 = vmatprep.subr.mxu0 0.0
        %1824 = vmatpush1.xpose.msra.mxu0 %v1768
        %1825 = vmatprep.subr.mxu0 0.0
        %1826 = vmatpush1.xpose.msra.mxu0 %v1765
        %1827 = vmatprep.subr.mxu0 0.0
        %1828 = vmatpush1.xpose.msra.mxu0 %v1762
        %1829 = vmatprep.subr.mxu0 0.0
        %1830 = vmatpush1.xpose.msra.mxu0 %v1759
        %1831 = vmatprep.subr.mxu0 0.0
        %1832 = vmatpush1.xpose.msra.mxu0 %v1756
        %1833 = vmatprep.subr.mxu0 0.0
        %1834 = vmatpush1.xpose.msra.mxu0 %v1753
        %1835 = vmatprep.subr.mxu0 0.0
        %1836 = vmatpush1.xpose.msra.mxu0 %v1750
        %1837 = vmatprep.subr.mxu0 0.0
        %1838 = vmatpush1.xpose.msra.mxu0 %v1747
        %1839 = vmatprep.subr.mxu0 0.0
        %1840 = vmatpush1.xpose.msra.mxu0 %v1744
        %1841 = vmatprep.subr.mxu0 0.0
        %1842 = vmatpush1.xpose.msra.mxu0 %v1741
        %1843 = vmatprep.subr.mxu0 0.0
        %1844 = vmatpush1.xpose.msra.mxu0 %v1738
        %1845 = vmatprep.subr.mxu0 0.0
        %1846 = vmatpush1.xpose.msra.mxu0 %v1735
        %1847 = vmatprep.subr.mxu0 0.0
        %1848 = vmatpush1.xpose.msra.mxu0 %v1732
        %1849 = vmatprep.subr.mxu0 0.0
        %1850 = vmatpush1.xpose.msra.mxu0 %v1729
        %1851 = vmatprep.subr.mxu0 0.0
        %1852 = vmatpush1.xpose.msra.mxu0 %v1726
        %1853 = vmatprep.subr.mxu0 0.0
        %1854 = vmatpush2.xpose.msra.mxu0 %v1819
        %1855 = vmatprep.subr.mxu0 0.0
        %1856 = vmatpush2.xpose.msra.mxu0 %v1816
        %1857 = vmatprep.subr.mxu0 0.0
        %1858 = vmatpush2.xpose.msra.mxu0 %v1813
        %1859 = vmatprep.subr.mxu0 0.0
        %1860 = vmatpush2.xpose.msra.mxu0 %v1810
        %1861 = vmatprep.subr.mxu0 0.0
        %1862 = vmatpush2.xpose.msra.mxu0 %v1807
        %1863 = vmatprep.subr.mxu0 0.0
        %1864 = vmatpush2.xpose.msra.mxu0 %v1804
        %1865 = vmatprep.subr.mxu0 0.0
        %1866 = vmatpush2.xpose.msra.mxu0 %v1801
        %1867 = vmatprep.subr.mxu0 0.0
        %1868 = vmatpush2.xpose.msra.mxu0 %v1798
        %1869 = vmatprep.subr.mxu0 0.0
        %1870 = vmatpush2.xpose.msra.mxu0 %v1795
        %1871 = vmatprep.subr.mxu0 0.0
        %1872 = vmatpush2.xpose.msra.mxu0 %v1792
        %1873 = vmatprep.subr.mxu0 0.0
        %1874 = vmatpush2.xpose.msra.mxu0 %v1789
        %1875 = vmatprep.subr.mxu0 0.0
        %1876 = vmatpush2.xpose.msra.mxu0 %v1786
        %1877 = vmatprep.subr.mxu0 0.0
        %1878 = vmatpush2.xpose.msra.mxu0 %v1783
        %1879 = vmatprep.subr.mxu0 0.0
        %1880 = vmatpush2.xpose.msra.mxu0 %v1780
        %1881 = vmatprep.subr.mxu0 0.0
        %1882 = vmatpush2.xpose.msra.mxu0 %v1777
        %1883 = vmatprep.subr.mxu0 0.0
        %1884 = vmatpush2.xpose.msra.mxu0 %v1774
        %1885 = vmatprep.mubr.f32.mxu0 0.0
        %1886 = vmatmul.mubr.f32.gmra.mxu0 %v1723
        %v1887 = vpop.f32.mrf.mxu0
        %v1888 = vadd.f32 0.0, %v1887
        %v1889 = vpop.f32.mrf.mxu0
        %v1890 = vadd.f32 0.0, %v1889
        %1891 = vdwg.mxu0
        %v1892 = vadd.f32 %v1686, %v1888
        %v1893 = vadd.f32 %v1687, %v1890
        %v1894 = vld [vmem:[%s1481 + $0x2] sm:$0xff]
        %v1895 = vld [vmem:[%s1481 + $0xa] sm:$0xff]
        %v1896 = vld [vmem:[%s1481 + $0x1a] sm:$0xff]
        %v1897 = vld [vmem:[%s1481 + $0x22] sm:$0xff]
        %v1898 = vld [vmem:[%s1481 + $0x32] sm:$0xff]
        %v1899 = vld [vmem:[%s1481 + $0x3a] sm:$0xff]
        %v1900 = vld [vmem:[%s1481 + $0x4a] sm:$0xff]
        %v1901 = vld [vmem:[%s1481 + $0x52] sm:$0xff]
        %v1902 = vld [vmem:[%s1481 + $0x62] sm:$0xff]
        %v1903 = vld [vmem:[%s1481 + $0x6a] sm:$0xff]
        %v1904 = vld [vmem:[%s1481 + $0x7a] sm:$0xff]
        %v1905 = vld [vmem:[%s1481 + $0x82] sm:$0xff]
        %v1906 = vld [vmem:[%s1481 + $0x92] sm:$0xff]
        %v1907 = vld [vmem:[%s1481 + $0x9a] sm:$0xff]
        %v1908 = vld [vmem:[%s1481 + $0xaa] sm:$0xff]
        %v1909 = vld [vmem:[%s1481 + $0xb2] sm:$0xff]
        %v1910 = vld [vmem:[%s1481 + $0xc2] sm:$0xff]
        %v1911 = vld [vmem:[%s1481 + $0xca] sm:$0xff]
        %v1912 = vld [vmem:[%s1481 + $0xda] sm:$0xff]
        %v1913 = vld [vmem:[%s1481 + $0xe2] sm:$0xff]
        %v1914 = vld [vmem:[%s1481 + $0xf2] sm:$0xff]
        %v1915 = vld [vmem:[%s1481 + $0xfa] sm:$0xff]
        %v1916 = vld [vmem:[%s1481 + $0x10a] sm:$0xff]
        %v1917 = vld [vmem:[%s1481 + $0x112] sm:$0xff]
        %v1918 = vld [vmem:[%s1481 + $0x122] sm:$0xff]
        %v1919 = vld [vmem:[%s1481 + $0x12a] sm:$0xff]
        %v1920 = vld [vmem:[%s1481 + $0x13a] sm:$0xff]
        %v1921 = vld [vmem:[%s1481 + $0x142] sm:$0xff]
        %v1922 = vld [vmem:[%s1481 + $0x152] sm:$0xff]
        %v1923 = vld [vmem:[%s1481 + $0x15a] sm:$0xff]
        %v1924 = vld [vmem:[%s1481 + $0x16a] sm:$0xff]
        %v1925 = vld [vmem:[%s1481 + $0x172] sm:$0xff]
        %s1926 = scalar_lea.vmem %s1, 64
        %v1927 = vld [vmem:[%s1926] sm:$0xff]
        %v1929 = vsel %vm311, %v1927, 0
        %v1932 = vsel %vm311, %v1894, 0
        %v1935 = vsel %vm311, %v1895, 0
        %v1938 = vsel %vm311, %v1896, 0
        %v1941 = vsel %vm311, %v1897, 0
        %v1944 = vsel %vm311, %v1898, 0
        %v1947 = vsel %vm311, %v1899, 0
        %v1950 = vsel %vm311, %v1900, 0
        %v1953 = vsel %vm311, %v1901, 0
        %v1956 = vsel %vm311, %v1902, 0
        %v1959 = vsel %vm311, %v1903, 0
        %v1962 = vsel %vm311, %v1904, 0
        %v1965 = vsel %vm311, %v1905, 0
        %v1968 = vsel %vm311, %v1906, 0
        %v1971 = vsel %vm311, %v1907, 0
        %v1974 = vsel %vm311, %v1908, 0
        %v1977 = vsel %vm311, %v1909, 0
        %v1980 = vsel %vm311, %v1910, 0
        %v1983 = vsel %vm311, %v1911, 0
        %v1986 = vsel %vm311, %v1912, 0
        %v1989 = vsel %vm311, %v1913, 0
        %v1992 = vsel %vm311, %v1914, 0
        %v1995 = vsel %vm311, %v1915, 0
        %v1998 = vsel %vm311, %v1916, 0
        %v2001 = vsel %vm311, %v1917, 0
        %v2004 = vsel %vm311, %v1918, 0
        %v2007 = vsel %vm311, %v1919, 0
        %v2010 = vsel %vm311, %v1920, 0
        %v2013 = vsel %vm311, %v1921, 0
        %v2016 = vsel %vm311, %v1922, 0
        %v2019 = vsel %vm311, %v1923, 0
        %v2022 = vsel %vm311, %v1924, 0
        %v2025 = vsel %vm311, %v1925, 0
        %2027 = vmatprep.subr.mxu0 0.0
        %2028 = vmatpush1.xpose.msra.mxu0 %v1977
        %2029 = vmatprep.subr.mxu0 0.0
        %2030 = vmatpush1.xpose.msra.mxu0 %v1974
        %2031 = vmatprep.subr.mxu0 0.0
        %2032 = vmatpush1.xpose.msra.mxu0 %v1971
        %2033 = vmatprep.subr.mxu0 0.0
        %2034 = vmatpush1.xpose.msra.mxu0 %v1968
        %2035 = vmatprep.subr.mxu0 0.0
        %2036 = vmatpush1.xpose.msra.mxu0 %v1965
        %2037 = vmatprep.subr.mxu0 0.0
        %2038 = vmatpush1.xpose.msra.mxu0 %v1962
        %2039 = vmatprep.subr.mxu0 0.0
        %2040 = vmatpush1.xpose.msra.mxu0 %v1959
        %2041 = vmatprep.subr.mxu0 0.0
        %2042 = vmatpush1.xpose.msra.mxu0 %v1956
        %2043 = vmatprep.subr.mxu0 0.0
        %2044 = vmatpush1.xpose.msra.mxu0 %v1953
        %2045 = vmatprep.subr.mxu0 0.0
        %2046 = vmatpush1.xpose.msra.mxu0 %v1950
        %2047 = vmatprep.subr.mxu0 0.0
        %2048 = vmatpush1.xpose.msra.mxu0 %v1947
        %2049 = vmatprep.subr.mxu0 0.0
        %2050 = vmatpush1.xpose.msra.mxu0 %v1944
        %2051 = vmatprep.subr.mxu0 0.0
        %2052 = vmatpush1.xpose.msra.mxu0 %v1941
        %2053 = vmatprep.subr.mxu0 0.0
        %2054 = vmatpush1.xpose.msra.mxu0 %v1938
        %2055 = vmatprep.subr.mxu0 0.0
        %2056 = vmatpush1.xpose.msra.mxu0 %v1935
        %2057 = vmatprep.subr.mxu0 0.0
        %2058 = vmatpush1.xpose.msra.mxu0 %v1932
        %2059 = vmatprep.subr.mxu0 0.0
        %2060 = vmatpush2.xpose.msra.mxu0 %v2025
        %2061 = vmatprep.subr.mxu0 0.0
        %2062 = vmatpush2.xpose.msra.mxu0 %v2022
        %2063 = vmatprep.subr.mxu0 0.0
        %2064 = vmatpush2.xpose.msra.mxu0 %v2019
        %2065 = vmatprep.subr.mxu0 0.0
        %2066 = vmatpush2.xpose.msra.mxu0 %v2016
        %2067 = vmatprep.subr.mxu0 0.0
        %2068 = vmatpush2.xpose.msra.mxu0 %v2013
        %2069 = vmatprep.subr.mxu0 0.0
        %2070 = vmatpush2.xpose.msra.mxu0 %v2010
        %2071 = vmatprep.subr.mxu0 0.0
        %2072 = vmatpush2.xpose.msra.mxu0 %v2007
        %2073 = vmatprep.subr.mxu0 0.0
        %2074 = vmatpush2.xpose.msra.mxu0 %v2004
        %2075 = vmatprep.subr.mxu0 0.0
        %2076 = vmatpush2.xpose.msra.mxu0 %v2001
        %2077 = vmatprep.subr.mxu0 0.0
        %2078 = vmatpush2.xpose.msra.mxu0 %v1998
        %2079 = vmatprep.subr.mxu0 0.0
        %2080 = vmatpush2.xpose.msra.mxu0 %v1995
        %2081 = vmatprep.subr.mxu0 0.0
        %2082 = vmatpush2.xpose.msra.mxu0 %v1992
        %2083 = vmatprep.subr.mxu0 0.0
        %2084 = vmatpush2.xpose.msra.mxu0 %v1989
        %2085 = vmatprep.subr.mxu0 0.0
        %2086 = vmatpush2.xpose.msra.mxu0 %v1986
        %2087 = vmatprep.subr.mxu0 0.0
        %2088 = vmatpush2.xpose.msra.mxu0 %v1983
        %2089 = vmatprep.subr.mxu0 0.0
        %2090 = vmatpush2.xpose.msra.mxu0 %v1980
        %2091 = vmatprep.mubr.f32.mxu0 0.0
        %2092 = vmatmul.mubr.f32.gmra.mxu0 %v1929
        %v2093 = vpop.f32.mrf.mxu0
        %v2094 = vadd.f32 0.0, %v2093
        %v2095 = vpop.f32.mrf.mxu0
        %v2096 = vadd.f32 0.0, %v2095
        %2097 = vdwg.mxu0
        %v2098 = vadd.f32 %v1892, %v2094
        %v2099 = vadd.f32 %v1893, %v2096
        %2100 = vst [vmem:[%s219] sm:$0xff] %v2098
        %2101 = vst [vmem:[%s219 + $0x8] sm:$0xff] %v2099
        %p2102 = scmp.eq.s32.totalorder %s24, 0
        // Predicated region
        $region33: #{tpu_custom_call.1} parent=31 // pred_check
          %p2103 = pneg %p2102
        $region34: #{tpu_custom_call.1} parent=31 // pred_check_branch
          %2105 = sbr.rel (%p2103) target = $region36
        $region35: #{tpu_custom_call.1} parent=31 // pred_region
          %vm2106 = vcmask 15360
          %2107 = vst.msk [vmem:[%s240] sm:$0xff] %vm2106, 0.0
        $region36: #{tpu_custom_call.1} parent=31 // pred_fallthru
          _
        %v2108 = vld [vmem:[%s234] sm:$0x3]
        %v2110 = vlaneseq
        %v2111 = vshrl.u32 %v2110, 7
        %v2112 = vsub.s32 0, %v2111
        %v2113 = vrot.slane %v2108, %v2112
        %v2114 = vlaneseq
        %v2115 = vshrl.u32 %v2114, 7
        %v2116 = vsub.s32 1, %v2115
        %v2117 = vrot.slane %v2108, %v2116
        %v2120 = vmul.f32 %v2098, %v2113
        %v2121 = vmul.f32 %v2099, %v2117
        %v2122 = vadd.f32 %v2120, %v2121
        %2123 = vadd.xlane.f32.xlu0 %v2122
        %v2124 = vpop.xlane.xlu0 %2123
        %v2125 = vmul.f32 %v2120, %v2120
        %v2126 = vmul.f32 %v2121, %v2121
        %v2127 = vadd.f32 %v2125, %v2126
        %2128 = vadd.xlane.f32.xlu0 %v2127
        %v2129 = vpop.xlane.xlu0 %2128
        %v2130 = vld [vmem:[%s240] sm:$0xff]
        %vm2131 = vcmask 7168
        %v2132 = vsel %vm2131, %v2124, %v2129
        %v2133 = vadd.f32 %v2130, %v2132
        %vm2134 = vcmask 15360
        %2135 = vst.msk [vmem:[%s240] sm:$0xff] %vm2134, %v2133
        %s2136 = sand.u32 %s114, 1
        %s2137 = scalar_lea.sflag [#allocation3], %s2136
        %s2138 = sand.u32 %s114, 1
        %s2139 = smul.addr %s2138, 16
        %s2140 = scalar_lea.vmem [#allocation2], %s2139
        %p2141 = scmp.lt.s32.totalorder %s23, 1
        %s2142 = scalar_select %p2141, %s23, 1
        %s2143 = smul.addr %s2142, 8
        %s2144 = scalar_lea.vmem %s4, %s2143
        // Predicated region
        $region37: #{tpu_custom_call.1} parent=31 // pred_check
          %p2145 = pneg %p124
        $region38: #{tpu_custom_call.1} parent=31 // pred_check_branch
          %2147 = sbr.rel (%p2145) target = $region40
        $region39: #{tpu_custom_call.1} parent=31 // pred_region
          %s2148 = smul.u32 2, %s24
          %s2150 = ssub.s32 256, 256
          %2151 = vsyncadd %s2137, %s2150
          %s2152 = smul.addr %s23, 2
          %s2153 = sadd.s32 %s2148, %s2152
          %s2154 = smul.addr %s2153, 128
          %s2155 = scalar_lea.hbm %s3, %s2154
          %s2157 = sshll.u32 %s2140, 4
          %s2158 = int_to_ptr.vmem [resolvable:$true] %s2157
          %2160 = dma.vmem_to_hbm [thread:$0]  %s2158, 256, %s2155, %s2137
        $region40: #{tpu_custom_call.1} parent=31 // pred_fallthru
          _
        // Predicated region
        $region41: #{tpu_custom_call.1} parent=31 // pred_check
          %p2161 = pneg %p150
        $region42: #{tpu_custom_call.1} parent=31 // pred_check_branch
          %2163 = sbr.rel (%p2161) target = $region44
        $region43: #{tpu_custom_call.1} parent=31 // pred_region
          _
        $region44: #{tpu_custom_call.1} parent=31 // pred_fallthru
          _
      $region32: #{tpu_custom_call.1} parent=5 // pred_fallthru
        _
      %p2164 = scmp.le.s32.totalorder 2, %s14
      // Predicated region
      $region45: #{tpu_custom_call.1} parent=5 // pred_check
        %p2165 = pneg %p2164
      $region46: #{tpu_custom_call.1} parent=5 // pred_check_branch
        %2167 = sbr.rel (%p2165) target = $region48
      $region47: #{tpu_custom_call.1} parent=5 // pred_region
        %s2168 = ssub.s32 %s14, 2
        // Predicated region
        $region49: #{tpu_custom_call.1} parent=47 // pred_check
          %p2169 = pneg %p130
        $region50: #{tpu_custom_call.1} parent=47 // pred_check_branch
          %2171 = sbr.rel (%p2169) target = $region52
        $region51: #{tpu_custom_call.1} parent=47 // pred_region
          %s2172 = sand.u32 %s115, 1
          %s2173 = scalar_lea.sflag [#allocation3], %s2172
          %s2174 = sand.u32 %s115, 1
          %s2175 = smul.addr %s2174, 16
          %s2176 = scalar_lea.vmem [#allocation2], %s2175
          %2177 = dma.done %s2173, 256
        $region52: #{tpu_custom_call.1} parent=47 // pred_fallthru
          _
        // Predicated region
        $region53: #{tpu_custom_call.1} parent=47 // pred_check
          %p2178 = pneg %p156
        $region54: #{tpu_custom_call.1} parent=47 // pred_check_branch
          %2180 = sbr.rel (%p2178) target = $region56
        $region55: #{tpu_custom_call.1} parent=47 // pred_region
          %p2181 = scmp.lt.s32.totalorder %s25, 1
          %s2182 = scalar_select %p2181, %s25, 1
          %s2183 = smul.addr %s2182, 8
          %s2184 = scalar_lea.vmem %s4, %s2183
        $region56: #{tpu_custom_call.1} parent=47 // pred_fallthru
          _
      $region48: #{tpu_custom_call.1} parent=5 // pred_fallthru
        _
    $region6: #{tpu_custom_call.1} parent=1 // loop_footer
      %s18 = sadd.s32 1, %s14
    $region7: #{tpu_custom_call.1} parent=1 // loop_footer_branch
      %13 = sbr.rel target = $region3
    $region8: #{tpu_custom_call.1} parent=1 // loop_exit
      _
    %2185 = vsyncpa [#allocation3], 1
    %s2186 = scalar_lea.sflag [#allocation3], 1
    %2187 = vsyncpa %s2186, 1

</llo_original>
